<compile_context>
chip_gen: v7x
topology: tpu7x:2x2x1
jax: 0.10.0
libtpu: 0.0.40
codegen_flags: <defaults>
</compile_context>

<pallas_src>
import functools

import jax
import jax.numpy as jnp
from jax import lax
from jax.experimental import pallas as pl
from jax.experimental.pallas import tpu as pltpu


def _attention_gate_kernel(x_ref, k_ref, adw_ref, bnp_ref, out_ref,
                           conv_sc, s1_sc, s2_sc, cshift_sc, comp_pad_sc,
                           sum_sc, sq_sc, bn_shift0_sc, bn_scale_sc,
                           bn_shift_sc, gate_sc,
                           *, C, H, W, PAD, n_count, eps):
    phase = pl.program_id(0)                 # 0: compress+conv+stats, 1: bn+gate
    n = pl.program_id(1)                     # image index
    ct = pl.program_id(2)                    # channel-tile index
    last_ct = pl.num_programs(2) - 1

    # ------------------------------------------------------------------ init
    @pl.when(jnp.logical_and(phase == 0, jnp.logical_and(n == 0, ct == 0)))
    def _init():
        sum_sc[...] = jnp.zeros_like(sum_sc)
        sq_sc[...] = jnp.zeros_like(sq_sc)
        # Zero ring written once; the interior is overwritten for every image,
        # so the pad stays valid for the whole grid.
        comp_pad_sc[...] = jnp.zeros_like(comp_pad_sc)

    # ---------------------------------------- phase 0a: channel-stat partials
    @pl.when(phase == 0)
    def _accumulate_channel_stats():
        xb = x_ref[0].astype(jnp.float32)           # (CB, H, W)

        @pl.when(ct == 0)
        def _():
            # Per-pixel shift (channel 0 plane) for a numerically stable
            # one-pass variance across channel tiles.
            cshift_sc[...] = xb[0]
            s1_sc[...] = jnp.zeros_like(s1_sc)
            s2_sc[...] = jnp.zeros_like(s2_sc)

        d = xb - cshift_sc[...]                     # broadcast over channels
        s1_sc[...] += jnp.sum(d, axis=0)
        s2_sc[...] += jnp.sum(d * d, axis=0)

    # -------------------------------- phase 0b: compress + 7x7 conv + BN stats
    @pl.when(jnp.logical_and(phase == 0, ct == last_ct))
    def _compress_conv_stats():
        inv_c = 1.0 / C
        # PyTorch x.std(dim=1) is unbiased (divide by C-1); C==1 would give NaN
        # in PyTorch — we guard the divisor instead (documented deviation).
        inv_cm1 = 1.0 / max(C - 1, 1)
        s1 = s1_sc[...]
        s2 = s2_sc[...]
        mean_c = cshift_sc[...] + s1 * inv_c
        var_c = jnp.maximum((s2 - s1 * s1 * inv_c) * inv_cm1, 0.0)
        std_c = jnp.sqrt(var_c)
        w0 = adw_ref[0]                              # sigmoid(ADPool.weight[0])
        w1 = adw_ref[1]
        comp = (0.5 + w0) * std_c + (0.5 + w1) * mean_c   # (H, W)

        # Write the compress map into the interior of the padded VMEM scratch;
        # the zero ring makes every conv tap a plain static slice.
        comp_pad_sc[PAD:PAD + H, PAD:PAD + W] = comp

        # 7x7 conv (cross-correlation, bias=False): the 7 lane-direction (dj)
        # shifted slabs are taken once, the di offsets are sublane-only, and
        # the 49 MACs are spread across 4 independent accumulator chains.
        K = 2 * PAD + 1
        cp = comp_pad_sc[...]                        # (Hp, Wp)
        cols = [cp[:, dj:dj + W] for dj in range(K)]        # 7 x (Hp, W)
        accs = [jnp.zeros((H, W), jnp.float32) for _ in range(4)]
        idx = 0
        for di in range(K):
            for dj in range(K):
                accs[idx % 4] = accs[idx % 4] + k_ref[di * K + dj] * cols[dj][di:di + H, :]
                idx += 1
        acc = (accs[0] + accs[1]) + (accs[2] + accs[3])
        conv_sc[n] = acc                             # resident for phase 1

        # BN batch statistics, one-pass on values shifted by conv[0,0,0] of the
        # first image (removes the common-mode cancellation risk).
        @pl.when(n == 0)
        def _():
            bn_shift0_sc[...] = acc[0:1, 0:1]
        da = acc - bn_shift0_sc[...]
        sum_sc[...] += jnp.sum(da, axis=0, keepdims=True)     # (1, W) partials
        sq_sc[...] += jnp.sum(da * da, axis=0, keepdims=True)

    # --------------------------------------- phase 1a: hoisted BN scale/shift
    @pl.when(jnp.logical_and(phase == 1, jnp.logical_and(n == 0, ct == 0)))
    def _bn_setup():
        inv_cnt = 1.0 / n_count
        tot = jnp.sum(sum_sc[...], axis=1, keepdims=True)     # (1, 1)
        tot_sq = jnp.sum(sq_sc[...], axis=1, keepdims=True)   # (1, 1)
        mean_d = tot * inv_cnt
        var = jnp.maximum(tot_sq * inv_cnt - mean_d * mean_d, 0.0)  # biased (BN fwd)
        mean = bn_shift0_sc[...] + mean_d
        inv_std = lax.rsqrt(var + eps)
        gamma = bnp_ref[0]
        beta = bnp_ref[1]
        bn_scale_sc[...] = gamma * inv_std
        bn_shift_sc[...] = beta - mean * (gamma * inv_std)

    # ---------------------------------- phase 1b: gate (once per image) + apply
    @pl.when(jnp.logical_and(phase == 1, ct == 0))
    def _gate():
        y = conv_sc[n] * bn_scale_sc[...] + bn_shift_sc[...]  # (H, W)
        gate_sc[...] = 1.0 / (1.0 + jnp.exp(-y))              # sigmoid (EUP exp)

    @pl.when(phase == 1)
    def _apply():
        xb = x_ref[0].astype(jnp.float32)                     # (CB, H, W)
        out_ref[0] = (xb * gate_sc[...]).astype(out_ref.dtype)


def _pick_channel_tile(C, H, W, itemsize, budget_bytes=24 << 20):
    """Largest divisor of C whose (in + out, double-buffered) blocks fit budget."""
    def rup(a, b):
        return (a + b - 1) // b * b
    plane = rup(H, 8) * rup(W, 128) * itemsize        # lane/sublane-padded plane
    max_cb = max(1, int(budget_bytes // (4 * plane))) # 2 bufs x (in + out)
    cb = min(C, max_cb)
    while C % cb != 0:
        cb -= 1
    return max(cb, 1)


def attention_gate_forward(x, conv_weight, ad_weight, bn_gamma, bn_beta, *, eps=1e-5):
    """x: (N, C, H, W); conv_weight: (1, 1, k, k); ad_weight: (2,); bn_*: (1,)."""
    N, C, H, W = x.shape
    ksz = conv_weight.shape[-1]
    PAD = (ksz - 1) // 2
    Hp, Wp = H + 2 * PAD, W + 2 * PAD

    itemsize = jnp.dtype(x.dtype).itemsize
    CB = _pick_channel_tile(C, H, W, itemsize)
    CT = C // CB

    # NOTE: conv_sc keeps one f32 (H, W) map per image resident in VMEM; for
    # very large N*H*W it should be spilled to HBM (pl.ANY + make_async_copy).
    k_flat = conv_weight.reshape(-1).astype(jnp.float32)                   # (k*k,)
    adw = jax.nn.sigmoid(ad_weight.astype(jnp.float32))                    # (2,)
    bnp = jnp.concatenate(
        [bn_gamma.reshape(-1), bn_beta.reshape(-1)]).astype(jnp.float32)   # (2,)

    kernel = functools.partial(
        _attention_gate_kernel, C=C, H=H, W=W, PAD=PAD,
        n_count=float(N * H * W), eps=float(eps))

    return pl.pallas_call(
        kernel,
        out_shape=jax.ShapeDtypeStruct((N, C, H, W), x.dtype),
        grid_spec=pltpu.PrefetchScalarGridSpec(
            num_scalar_prefetch=0,
            grid=(2, N, CT),                      # (phase, image, channel-tile)
            in_specs=[
                pl.BlockSpec((1, CB, H, W), lambda p, n, ct: (n, ct, 0, 0)),
                pl.BlockSpec(memory_space=pltpu.MemorySpace.SMEM),   # conv weights
                pl.BlockSpec(memory_space=pltpu.MemorySpace.SMEM),   # ADPool sigmoid weights
                pl.BlockSpec(memory_space=pltpu.MemorySpace.SMEM),   # BN gamma, beta
            ],
            # During phase 0 the output block index is pinned to (0, 0) and
            # never written, so no garbage writeback; in phase 1 each block is
            # written exactly once and flushed with its final value.  This
            # relies on the sequential (phase, n, ct) grid order — do not mark
            # these axes parallel (the shared BN-stat scratch also forbids it).
            out_specs=pl.BlockSpec((1, CB, H, W),
                                   lambda p, n, ct: (p * n, p * ct, 0, 0)),
            scratch_shapes=[
                pltpu.VMEM((N, H, W), jnp.float32),   # conv maps (resident across phases)
                pltpu.VMEM((H, W), jnp.float32),      # channel-sum partial (shifted)
                pltpu.VMEM((H, W), jnp.float32),      # channel-sumsq partial (shifted)
                pltpu.VMEM((H, W), jnp.float32),      # per-pixel channel shift (chan 0)
                pltpu.VMEM((Hp, Wp), jnp.float32),    # zero-padded compress map
                pltpu.VMEM((1, W), jnp.float32),      # BN running sum (column partials)
                pltpu.VMEM((1, W), jnp.float32),      # BN running sumsq
                pltpu.VMEM((1, 1), jnp.float32),      # BN scalar shift (conv[0,0,0])
                pltpu.VMEM((1, 1), jnp.float32),      # hoisted BN scale
                pltpu.VMEM((1, 1), jnp.float32),      # hoisted BN shift
                pltpu.VMEM((H, W), jnp.float32),      # gate (reused across channel tiles)
            ]),
        compiler_params=pltpu.CompilerParams(
            dimension_semantics=("arbitrary", "arbitrary", "arbitrary"),
            # > default scoped limit (16/32 MiB), < v7x physical 64 MiB;
            # on v5e/v6e (128 MiB) this could be raised further.
            vmem_limit_bytes=48 * 1024 * 1024),
    )(x, k_flat, adw, bnp)


def reference_forward(x, conv_weight, ad_weight, bn_gamma, bn_beta, *, eps=1e-5):
    x = x.astype(jnp.float32)
    std = jnp.std(x, axis=1, keepdims=True, ddof=1)              # PyTorch Tensor.std default
    avg = jnp.mean(x, axis=1, keepdims=True)
    w = jax.nn.sigmoid(ad_weight.astype(jnp.float32))
    comp = 0.5 * (std + avg) + w[0] * std + w[1] * avg           # (N, 1, H, W)
    pad = (conv_weight.shape[-1] - 1) // 2
    conv = lax.conv_general_dilated(
        comp, conv_weight.astype(jnp.float32),
        window_strides=(1, 1), padding=[(pad, pad), (pad, pad)],
        dimension_numbers=("NCHW", "OIHW", "NCHW"),
        precision=lax.Precision.HIGHEST)
    mean = conv.mean(axis=(0, 2, 3), keepdims=True)
    var = conv.var(axis=(0, 2, 3), keepdims=True)                # biased, PyTorch BN training fwd
    y = (conv - mean) / jnp.sqrt(var + eps) * bn_gamma.reshape(1, -1, 1, 1) \
        + bn_beta.reshape(1, -1, 1, 1)
    return x * jax.nn.sigmoid(y)


if __name__ == "__main__":
    key = jax.random.PRNGKey(0)
    k_x, k_w, k_a = jax.random.split(key, 3)

    N, C, H, W = 2, 4, 16, 16
    KS = 7

    x = jax.random.normal(k_x, (N, C, H, W), dtype=jnp.float32)
    # Conv2d(1, 1, 7, padding=3, bias=False) weight.
    conv_weight = jax.random.normal(k_w, (1, 1, KS, KS), dtype=jnp.float32) * 0.1
    # ADPool: nn.Parameter(torch.rand(2)).
    ad_weight = jax.random.uniform(k_a, (2,), dtype=jnp.float32)
    # BatchNorm2d(1) default init: weight=1, bias=0.
    bn_gamma = jnp.ones((1,), dtype=jnp.float32)
    bn_beta = jnp.zeros((1,), dtype=jnp.float32)

    out = attention_gate_forward(x, conv_weight, ad_weight, bn_gamma, bn_beta, eps=1e-5)
    out = jax.block_until_ready(out)

    ref = reference_forward(x, conv_weight, ad_weight, bn_gamma, bn_beta, eps=1e-5)
    assert out.shape == (N, C, H, W)
    err = float(jnp.max(jnp.abs(out - ref)))
    assert jnp.allclose(out, ref, atol=2e-4, rtol=2e-3), f"max abs err {err}"

    print("KERNEL_OK")
</pallas_src>

<mosaic_0001>
module attributes {stable_mosaic.version = 11 : i64} {
  func.func @_attention_gate_kernel(%arg0: i32, %arg1: i32, %arg2: i32, %arg3: memref<1x4x16x16xf32, #tpu.memory_space<vmem>>, %arg4: memref<49xf32, #tpu.memory_space<smem>>, %arg5: memref<2xf32, #tpu.memory_space<smem>>, %arg6: memref<2xf32, #tpu.memory_space<smem>>, %arg7: memref<1x4x16x16xf32, #tpu.memory_space<vmem>>, %arg8: memref<2x16x16xf32, #tpu.memory_space<vmem>>, %arg9: memref<16x16xf32, #tpu.memory_space<vmem>>, %arg10: memref<16x16xf32, #tpu.memory_space<vmem>>, %arg11: memref<16x16xf32, #tpu.memory_space<vmem>>, %arg12: memref<22x22xf32, #tpu.memory_space<vmem>>, %arg13: memref<1x16xf32, #tpu.memory_space<vmem>>, %arg14: memref<1x16xf32, #tpu.memory_space<vmem>>, %arg15: memref<1x1xf32, #tpu.memory_space<vmem>>, %arg16: memref<1x1xf32, #tpu.memory_space<vmem>>, %arg17: memref<1x1xf32, #tpu.memory_space<vmem>>, %arg18: memref<16x16xf32, #tpu.memory_space<vmem>>) attributes {dimension_semantics = [#tpu.dimension_semantics<arbitrary>, #tpu.dimension_semantics<arbitrary>, #tpu.dimension_semantics<arbitrary>], iteration_bounds = array<i64: 2, 2, 1>, scalar_prefetch = 0 : i64, scratch_operands = 11 : i64, tpu.core_type = #tpu.core_type<tc>, window_params = [{transform_indices = @transform_0, window_bounds = array<i64: 1, 4, 16, 16>}, {transform_indices = @transform_1, window_bounds = array<i64: 49>}, {transform_indices = @transform_2, window_bounds = array<i64: 2>}, {transform_indices = @transform_3, window_bounds = array<i64: 2>}, {transform_indices = @transform_4, window_bounds = array<i64: 1, 4, 16, 16>}]} {
    %c0_i32 = arith.constant 0 : i32
    %0 = arith.cmpi eq, %arg0, %c0_i32 : i32
    %c0_i32_0 = arith.constant 0 : i32
    %1 = arith.cmpi eq, %arg1, %c0_i32_0 : i32
    %c0_i32_1 = arith.constant 0 : i32
    %2 = arith.cmpi eq, %arg2, %c0_i32_1 : i32
    %3 = arith.andi %1, %2 : i1
    %4 = arith.andi %0, %3 : i1
    %5 = arith.extui %4 : i1 to i32
    %c0_i32_2 = arith.constant 0 : i32
    %6 = arith.cmpi ne, %5, %c0_i32_2 : i32
    scf.if %6 {
      %cst = arith.constant 0.000000e+00 : f32
      %30 = vector.broadcast %cst : f32 to vector<1x16xf32>
      %c0 = arith.constant 0 : index
      %c0_16 = arith.constant 0 : index
      %31 = vector.load %arg13[%c0, %c0_16] : memref<1x16xf32, #tpu.memory_space<vmem>>, vector<1x16xf32>
      tpu.vector_store %arg13[%c0, %c0_16], %30 {strides = array<i32>} : memref<1x16xf32, #tpu.memory_space<vmem>>, vector<1x16xf32>,
      %cst_17 = arith.constant 0.000000e+00 : f32
      %32 = vector.broadcast %cst_17 : f32 to vector<1x16xf32>
      %c0_18 = arith.constant 0 : index
      %c0_19 = arith.constant 0 : index
      %33 = vector.load %arg14[%c0_18, %c0_19] : memref<1x16xf32, #tpu.memory_space<vmem>>, vector<1x16xf32>
      tpu.vector_store %arg14[%c0_18, %c0_19], %32 {strides = array<i32>} : memref<1x16xf32, #tpu.memory_space<vmem>>, vector<1x16xf32>,
      %cst_20 = arith.constant 0.000000e+00 : f32
      %34 = vector.broadcast %cst_20 : f32 to vector<22x22xf32>
      %c0_21 = arith.constant 0 : index
      %c0_22 = arith.constant 0 : index
      %35 = vector.load %arg12[%c0_21, %c0_22] : memref<22x22xf32, #tpu.memory_space<vmem>>, vector<22x22xf32>
      tpu.vector_store %arg12[%c0_21, %c0_22], %34 {strides = array<i32>} : memref<22x22xf32, #tpu.memory_space<vmem>>, vector<22x22xf32>,
    } else {
    }
    %c0_i32_3 = arith.constant 0 : i32
    %7 = arith.cmpi eq, %arg0, %c0_i32_3 : i32
    %8 = arith.extui %7 : i1 to i32
    %c0_i32_4 = arith.constant 0 : i32
    %9 = arith.cmpi ne, %8, %c0_i32_4 : i32
    scf.if %9 {
      %c0 = arith.constant 0 : index
      %c0_16 = arith.constant 0 : index
      %c0_17 = arith.constant 0 : index
      %c0_18 = arith.constant 0 : index
      %30 = vector.load %arg3[%c0, %c0_16, %c0_17, %c0_18] : memref<1x4x16x16xf32, #tpu.memory_space<vmem>>, vector<1x4x16x16xf32>
      %31 = vector.shape_cast %30 : vector<1x4x16x16xf32> to vector<4x16x16xf32>
      %c0_i32_19 = arith.constant 0 : i32
      %32 = arith.cmpi eq, %arg2, %c0_i32_19 : i32
      %33 = arith.extui %32 : i1 to i32
      %c0_i32_20 = arith.constant 0 : i32
      %34 = arith.cmpi ne, %33, %c0_i32_20 : i32
      scf.if %34 {
        %48 = vector.extract_strided_slice %31 {offsets = [0, 0, 0], sizes = [1, 16, 16], strides = [1, 1, 1]} : vector<4x16x16xf32> to vector<1x16x16xf32>
        %49 = vector.shape_cast %48 : vector<1x16x16xf32> to vector<16x16xf32>
        %c0_32 = arith.constant 0 : index
        %c0_33 = arith.constant 0 : index
        %50 = vector.load %arg11[%c0_32, %c0_33] : memref<16x16xf32, #tpu.memory_space<vmem>>, vector<16x16xf32>
        tpu.vector_store %arg11[%c0_32, %c0_33], %49 {strides = array<i32>} : memref<16x16xf32, #tpu.memory_space<vmem>>, vector<16x16xf32>,
        %cst_34 = arith.constant 0.000000e+00 : f32
        %51 = vector.broadcast %cst_34 : f32 to vector<16x16xf32>
        %c0_35 = arith.constant 0 : index
        %c0_36 = arith.constant 0 : index
        %52 = vector.load %arg9[%c0_35, %c0_36] : memref<16x16xf32, #tpu.memory_space<vmem>>, vector<16x16xf32>
        tpu.vector_store %arg9[%c0_35, %c0_36], %51 {strides = array<i32>} : memref<16x16xf32, #tpu.memory_space<vmem>>, vector<16x16xf32>,
        %cst_37 = arith.constant 0.000000e+00 : f32
        %53 = vector.broadcast %cst_37 : f32 to vector<16x16xf32>
        %c0_38 = arith.constant 0 : index
        %c0_39 = arith.constant 0 : index
        %54 = vector.load %arg10[%c0_38, %c0_39] : memref<16x16xf32, #tpu.memory_space<vmem>>, vector<16x16xf32>
        tpu.vector_store %arg10[%c0_38, %c0_39], %53 {strides = array<i32>} : memref<16x16xf32, #tpu.memory_space<vmem>>, vector<16x16xf32>,
      } else {
      }
      %c0_21 = arith.constant 0 : index
      %c0_22 = arith.constant 0 : index
      %35 = vector.load %arg11[%c0_21, %c0_22] : memref<16x16xf32, #tpu.memory_space<vmem>>, vector<16x16xf32>
      %36 = vector.shape_cast %35 : vector<16x16xf32> to vector<1x16x16xf32>
      %37 = vector.broadcast %36 : vector<1x16x16xf32> to vector<4x16x16xf32>
      %38 = arith.subf %31, %37 : vector<4x16x16xf32>
      %c0_23 = arith.constant 0 : index
      %c0_24 = arith.constant 0 : index
      %39 = vector.load %arg9[%c0_23, %c0_24] : memref<16x16xf32, #tpu.memory_space<vmem>>, vector<16x16xf32>
      %cst = arith.constant dense<0.000000e+00> : vector<16x16xf32>
      %40 = vector.multi_reduction <add>, %38, %cst [0] : vector<4x16x16xf32> to vector<16x16xf32>
      %41 = arith.addf %39, %40 : vector<16x16xf32>
      %c0_25 = arith.constant 0 : index
      %c0_26 = arith.constant 0 : index
      %42 = vector.load %arg9[%c0_25, %c0_26] : memref<16x16xf32, #tpu.memory_space<vmem>>, vector<16x16xf32>
      tpu.vector_store %arg9[%c0_25, %c0_26], %41 {strides = array<i32>} : memref<16x16xf32, #tpu.memory_space<vmem>>, vector<16x16xf32>,
      %c0_27 = arith.constant 0 : index
      %c0_28 = arith.constant 0 : index
      %43 = vector.load %arg10[%c0_27, %c0_28] : memref<16x16xf32, #tpu.memory_space<vmem>>, vector<16x16xf32>
      %44 = arith.mulf %38, %38 : vector<4x16x16xf32>
      %cst_29 = arith.constant dense<0.000000e+00> : vector<16x16xf32>
      %45 = vector.multi_reduction <add>, %44, %cst_29 [0] : vector<4x16x16xf32> to vector<16x16xf32>
      %46 = arith.addf %43, %45 : vector<16x16xf32>
      %c0_30 = arith.constant 0 : index
      %c0_31 = arith.constant 0 : index
      %47 = vector.load %arg10[%c0_30, %c0_31] : memref<16x16xf32, #tpu.memory_space<vmem>>, vector<16x16xf32>
      tpu.vector_store %arg10[%c0_30, %c0_31], %46 {strides = array<i32>} : memref<16x16xf32, #tpu.memory_space<vmem>>, vector<16x16xf32>,
    } else {
    }
    %c0_i32_5 = arith.constant 0 : i32
    %10 = arith.cmpi eq, %arg0, %c0_i32_5 : i32
    %c0_i32_6 = arith.constant 0 : i32
    %11 = arith.cmpi eq, %arg2, %c0_i32_6 : i32
    %12 = arith.andi %10, %11 : i1
    %13 = arith.extui %12 : i1 to i32
    %c0_i32_7 = arith.constant 0 : i32
    %14 = arith.cmpi ne, %13, %c0_i32_7 : i32
    scf.if %14 {
      %c0 = arith.constant 0 : index
      %c0_16 = arith.constant 0 : index
      %30 = vector.load %arg9[%c0, %c0_16] : memref<16x16xf32, #tpu.memory_space<vmem>>, vector<16x16xf32>
      %c0_17 = arith.constant 0 : index
      %c0_18 = arith.constant 0 : index
      %31 = vector.load %arg10[%c0_17, %c0_18] : memref<16x16xf32, #tpu.memory_space<vmem>>, vector<16x16xf32>
      %c0_19 = arith.constant 0 : index
      %c0_20 = arith.constant 0 : index
      %32 = vector.load %arg11[%c0_19, %c0_20] : memref<16x16xf32, #tpu.memory_space<vmem>>, vector<16x16xf32>
      %cst = arith.constant 2.500000e-01 : f32
      %33 = vector.broadcast %cst : f32 to vector<16x16xf32>
      %34 = arith.mulf %30, %33 : vector<16x16xf32>
      %35 = arith.addf %32, %34 : vector<16x16xf32>
      %36 = arith.mulf %30, %30 : vector<16x16xf32>
      %cst_21 = arith.constant 2.500000e-01 : f32
      %37 = vector.broadcast %cst_21 : f32 to vector<16x16xf32>
      %38 = arith.mulf %36, %37 : vector<16x16xf32>
      %39 = arith.subf %31, %38 : vector<16x16xf32>
      %cst_22 = arith.constant 0.333333343 : f32
      %40 = vector.broadcast %cst_22 : f32 to vector<16x16xf32>
      %41 = arith.mulf %39, %40 : vector<16x16xf32>
      %cst_23 = arith.constant 0.000000e+00 : f32
      %42 = vector.broadcast %cst_23 : f32 to vector<16x16xf32>
      %43 = arith.maximumf %41, %42 : vector<16x16xf32>
      %44 = math.sqrt %43 : vector<16x16xf32>
      %c0_24 = arith.constant 0 : index
      %45 = memref.load %arg5[%c0_24] : memref<2xf32, #tpu.memory_space<smem>>
      %c1 = arith.constant 1 : index
      %46 = memref.load %arg5[%c1] : memref<2xf32, #tpu.memory_space<smem>>
      %cst_25 = arith.constant 5.000000e-01 : f32
      %47 = arith.addf %cst_25, %45 : f32
      %48 = vector.broadcast %47 : f32 to vector<16x16xf32>
      %49 = arith.mulf %48, %44 : vector<16x16xf32>
      %cst_26 = arith.constant 5.000000e-01 : f32
      %50 = arith.addf %cst_26, %46 : f32
      %51 = vector.broadcast %50 : f32 to vector<16x16xf32>
      %52 = arith.mulf %51, %35 : vector<16x16xf32>
      %53 = arith.addf %49, %52 : vector<16x16xf32>
      %c3 = arith.constant 3 : index
      %c3_27 = arith.constant 3 : index
      %54 = vector.load %arg12[%c3, %c3_27] : memref<22x22xf32, #tpu.memory_space<vmem>>, vector<16x16xf32>
      tpu.vector_store %arg12[%c3, %c3_27], %53 {strides = array<i32>} : memref<22x22xf32, #tpu.memory_space<vmem>>, vector<16x16xf32>,
      %c0_28 = arith.constant 0 : index
      %c0_29 = arith.constant 0 : index
      %55 = vector.load %arg12[%c0_28, %c0_29] : memref<22x22xf32, #tpu.memory_space<vmem>>, vector<22x22xf32>
      %56 = vector.extract_strided_slice %55 {offsets = [0, 0], sizes = [22, 16], strides = [1, 1]} : vector<22x22xf32> to vector<22x16xf32>
      %57 = vector.extract_strided_slice %55 {offsets = [0, 1], sizes = [22, 16], strides = [1, 1]} : vector<22x22xf32> to vector<22x16xf32>
      %58 = vector.extract_strided_slice %55 {offsets = [0, 2], sizes = [22, 16], strides = [1, 1]} : vector<22x22xf32> to vector<22x16xf32>
      %59 = vector.extract_strided_slice %55 {offsets = [0, 3], sizes = [22, 16], strides = [1, 1]} : vector<22x22xf32> to vector<22x16xf32>
      %60 = vector.extract_strided_slice %55 {offsets = [0, 4], sizes = [22, 16], strides = [1, 1]} : vector<22x22xf32> to vector<22x16xf32>
      %61 = vector.extract_strided_slice %55 {offsets = [0, 5], sizes = [22, 16], strides = [1, 1]} : vector<22x22xf32> to vector<22x16xf32>
      %62 = vector.extract_strided_slice %55 {offsets = [0, 6], sizes = [22, 16], strides = [1, 1]} : vector<22x22xf32> to vector<22x16xf32>
      %cst_30 = arith.constant 0.000000e+00 : f32
      %63 = vector.broadcast %cst_30 : f32 to vector<16x16xf32>
      %cst_31 = arith.constant 0.000000e+00 : f32
      %64 = vector.broadcast %cst_31 : f32 to vector<16x16xf32>
      %cst_32 = arith.constant 0.000000e+00 : f32
      %65 = vector.broadcast %cst_32 : f32 to vector<16x16xf32>
      %cst_33 = arith.constant 0.000000e+00 : f32
      %66 = vector.broadcast %cst_33 : f32 to vector<16x16xf32>
      %c0_34 = arith.constant 0 : index
      %67 = memref.load %arg4[%c0_34] : memref<49xf32, #tpu.memory_space<smem>>
      %68 = vector.extract_strided_slice %56 {offsets = [0, 0], sizes = [16, 16], strides = [1, 1]} : vector<22x16xf32> to vector<16x16xf32>
      %69 = vector.broadcast %67 : f32 to vector<16x16xf32>
      %70 = arith.mulf %69, %68 : vector<16x16xf32>
      %71 = arith.addf %63, %70 : vector<16x16xf32>
      %c1_35 = arith.constant 1 : index
      %72 = memref.load %arg4[%c1_35] : memref<49xf32, #tpu.memory_space<smem>>
      %73 = vector.extract_strided_slice %57 {offsets = [0, 0], sizes = [16, 16], strides = [1, 1]} : vector<22x16xf32> to vector<16x16xf32>
      %74 = vector.broadcast %72 : f32 to vector<16x16xf32>
      %75 = arith.mulf %74, %73 : vector<16x16xf32>
      %76 = arith.addf %64, %75 : vector<16x16xf32>
      %c2 = arith.constant 2 : index
      %77 = memref.load %arg4[%c2] : memref<49xf32, #tpu.memory_space<smem>>
      %78 = vector.extract_strided_slice %58 {offsets = [0, 0], sizes = [16, 16], strides = [1, 1]} : vector<22x16xf32> to vector<16x16xf32>
      %79 = vector.broadcast %77 : f32 to vector<16x16xf32>
      %80 = arith.mulf %79, %78 : vector<16x16xf32>
      %81 = arith.addf %65, %80 : vector<16x16xf32>
      %c3_36 = arith.constant 3 : index
      %82 = memref.load %arg4[%c3_36] : memref<49xf32, #tpu.memory_space<smem>>
      %83 = vector.extract_strided_slice %59 {offsets = [0, 0], sizes = [16, 16], strides = [1, 1]} : vector<22x16xf32> to vector<16x16xf32>
      %84 = vector.broadcast %82 : f32 to vector<16x16xf32>
      %85 = arith.mulf %84, %83 : vector<16x16xf32>
      %86 = arith.addf %66, %85 : vector<16x16xf32>
      %c4 = arith.constant 4 : index
      %87 = memref.load %arg4[%c4] : memref<49xf32, #tpu.memory_space<smem>>
      %88 = vector.extract_strided_slice %60 {offsets = [0, 0], sizes = [16, 16], strides = [1, 1]} : vector<22x16xf32> to vector<16x16xf32>
      %89 = vector.broadcast %87 : f32 to vector<16x16xf32>
      %90 = arith.mulf %89, %88 : vector<16x16xf32>
      %91 = arith.addf %71, %90 : vector<16x16xf32>
      %c5 = arith.constant 5 : index
      %92 = memref.load %arg4[%c5] : memref<49xf32, #tpu.memory_space<smem>>
      %93 = vector.extract_strided_slice %61 {offsets = [0, 0], sizes = [16, 16], strides = [1, 1]} : vector<22x16xf32> to vector<16x16xf32>
      %94 = vector.broadcast %92 : f32 to vector<16x16xf32>
      %95 = arith.mulf %94, %93 : vector<16x16xf32>
      %96 = arith.addf %76, %95 : vector<16x16xf32>
      %c6 = arith.constant 6 : index
      %97 = memref.load %arg4[%c6] : memref<49xf32, #tpu.memory_space<smem>>
      %98 = vector.extract_strided_slice %62 {offsets = [0, 0], sizes = [16, 16], strides = [1, 1]} : vector<22x16xf32> to vector<16x16xf32>
      %99 = vector.broadcast %97 : f32 to vector<16x16xf32>
      %100 = arith.mulf %99, %98 : vector<16x16xf32>
      %101 = arith.addf %81, %100 : vector<16x16xf32>
      %c7 = arith.constant 7 : index
      %102 = memref.load %arg4[%c7] : memref<49xf32, #tpu.memory_space<smem>>
      %103 = vector.extract_strided_slice %56 {offsets = [1, 0], sizes = [16, 16], strides = [1, 1]} : vector<22x16xf32> to vector<16x16xf32>
      %104 = vector.broadcast %102 : f32 to vector<16x16xf32>
      %105 = arith.mulf %104, %103 : vector<16x16xf32>
      %106 = arith.addf %86, %105 : vector<16x16xf32>
      %c8 = arith.constant 8 : index
      %107 = memref.load %arg4[%c8] : memref<49xf32, #tpu.memory_space<smem>>
      %108 = vector.extract_strided_slice %57 {offsets = [1, 0], sizes = [16, 16], strides = [1, 1]} : vector<22x16xf32> to vector<16x16xf32>
      %109 = vector.broadcast %107 : f32 to vector<16x16xf32>
      %110 = arith.mulf %109, %108 : vector<16x16xf32>
      %111 = arith.addf %91, %110 : vector<16x16xf32>
      %c9 = arith.constant 9 : index
      %112 = memref.load %arg4[%c9] : memref<49xf32, #tpu.memory_space<smem>>
      %113 = vector.extract_strided_slice %58 {offsets = [1, 0], sizes = [16, 16], strides = [1, 1]} : vector<22x16xf32> to vector<16x16xf32>
      %114 = vector.broadcast %112 : f32 to vector<16x16xf32>
      %115 = arith.mulf %114, %113 : vector<16x16xf32>
      %116 = arith.addf %96, %115 : vector<16x16xf32>
      %c10 = arith.constant 10 : index
      %117 = memref.load %arg4[%c10] : memref<49xf32, #tpu.memory_space<smem>>
      %118 = vector.extract_strided_slice %59 {offsets = [1, 0], sizes = [16, 16], strides = [1, 1]} : vector<22x16xf32> to vector<16x16xf32>
      %119 = vector.broadcast %117 : f32 to vector<16x16xf32>
      %120 = arith.mulf %119, %118 : vector<16x16xf32>
      %121 = arith.addf %101, %120 : vector<16x16xf32>
      %c11 = arith.constant 11 : index
      %122 = memref.load %arg4[%c11] : memref<49xf32, #tpu.memory_space<smem>>
      %123 = vector.extract_strided_slice %60 {offsets = [1, 0], sizes = [16, 16], strides = [1, 1]} : vector<22x16xf32> to vector<16x16xf32>
      %124 = vector.broadcast %122 : f32 to vector<16x16xf32>
      %125 = arith.mulf %124, %123 : vector<16x16xf32>
      %126 = arith.addf %106, %125 : vector<16x16xf32>
      %c12 = arith.constant 12 : index
      %127 = memref.load %arg4[%c12] : memref<49xf32, #tpu.memory_space<smem>>
      %128 = vector.extract_strided_slice %61 {offsets = [1, 0], sizes = [16, 16], strides = [1, 1]} : vector<22x16xf32> to vector<16x16xf32>
      %129 = vector.broadcast %127 : f32 to vector<16x16xf32>
      %130 = arith.mulf %129, %128 : vector<16x16xf32>
      %131 = arith.addf %111, %130 : vector<16x16xf32>
      %c13 = arith.constant 13 : index
      %132 = memref.load %arg4[%c13] : memref<49xf32, #tpu.memory_space<smem>>
      %133 = vector.extract_strided_slice %62 {offsets = [1, 0], sizes = [16, 16], strides = [1, 1]} : vector<22x16xf32> to vector<16x16xf32>
      %134 = vector.broadcast %132 : f32 to vector<16x16xf32>
      %135 = arith.mulf %134, %133 : vector<16x16xf32>
      %136 = arith.addf %116, %135 : vector<16x16xf32>
      %c14 = arith.constant 14 : index
      %137 = memref.load %arg4[%c14] : memref<49xf32, #tpu.memory_space<smem>>
      %138 = vector.extract_strided_slice %56 {offsets = [2, 0], sizes = [16, 16], strides = [1, 1]} : vector<22x16xf32> to vector<16x16xf32>
      %139 = vector.broadcast %137 : f32 to vector<16x16xf32>
      %140 = arith.mulf %139, %138 : vector<16x16xf32>
      %141 = arith.addf %121, %140 : vector<16x16xf32>
      %c15 = arith.constant 15 : index
      %142 = memref.load %arg4[%c15] : memref<49xf32, #tpu.memory_space<smem>>
      %143 = vector.extract_strided_slice %57 {offsets = [2, 0], sizes = [16, 16], strides = [1, 1]} : vector<22x16xf32> to vector<16x16xf32>
      %144 = vector.broadcast %142 : f32 to vector<16x16xf32>
      %145 = arith.mulf %144, %143 : vector<16x16xf32>
      %146 = arith.addf %126, %145 : vector<16x16xf32>
      %c16 = arith.constant 16 : index
      %147 = memref.load %arg4[%c16] : memref<49xf32, #tpu.memory_space<smem>>
      %148 = vector.extract_strided_slice %58 {offsets = [2, 0], sizes = [16, 16], strides = [1, 1]} : vector<22x16xf32> to vector<16x16xf32>
      %149 = vector.broadcast %147 : f32 to vector<16x16xf32>
      %150 = arith.mulf %149, %148 : vector<16x16xf32>
      %151 = arith.addf %131, %150 : vector<16x16xf32>
      %c17 = arith.constant 17 : index
      %152 = memref.load %arg4[%c17] : memref<49xf32, #tpu.memory_space<smem>>
      %153 = vector.extract_strided_slice %59 {offsets = [2, 0], sizes = [16, 16], strides = [1, 1]} : vector<22x16xf32> to vector<16x16xf32>
      %154 = vector.broadcast %152 : f32 to vector<16x16xf32>
      %155 = arith.mulf %154, %153 : vector<16x16xf32>
      %156 = arith.addf %136, %155 : vector<16x16xf32>
      %c18 = arith.constant 18 : index
      %157 = memref.load %arg4[%c18] : memref<49xf32, #tpu.memory_space<smem>>
      %158 = vector.extract_strided_slice %60 {offsets = [2, 0], sizes = [16, 16], strides = [1, 1]} : vector<22x16xf32> to vector<16x16xf32>
      %159 = vector.broadcast %157 : f32 to vector<16x16xf32>
      %160 = arith.mulf %159, %158 : vector<16x16xf32>
      %161 = arith.addf %141, %160 : vector<16x16xf32>
      %c19 = arith.constant 19 : index
      %162 = memref.load %arg4[%c19] : memref<49xf32, #tpu.memory_space<smem>>
      %163 = vector.extract_strided_slice %61 {offsets = [2, 0], sizes = [16, 16], strides = [1, 1]} : vector<22x16xf32> to vector<16x16xf32>
      %164 = vector.broadcast %162 : f32 to vector<16x16xf32>
      %165 = arith.mulf %164, %163 : vector<16x16xf32>
      %166 = arith.addf %146, %165 : vector<16x16xf32>
      %c20 = arith.constant 20 : index
      %167 = memref.load %arg4[%c20] : memref<49xf32, #tpu.memory_space<smem>>
      %168 = vector.extract_strided_slice %62 {offsets = [2, 0], sizes = [16, 16], strides = [1, 1]} : vector<22x16xf32> to vector<16x16xf32>
      %169 = vector.broadcast %167 : f32 to vector<16x16xf32>
      %170 = arith.mulf %169, %168 : vector<16x16xf32>
      %171 = arith.addf %151, %170 : vector<16x16xf32>
      %c21 = arith.constant 21 : index
      %172 = memref.load %arg4[%c21] : memref<49xf32, #tpu.memory_space<smem>>
      %173 = vector.extract_strided_slice %56 {offsets = [3, 0], sizes = [16, 16], strides = [1, 1]} : vector<22x16xf32> to vector<16x16xf32>
      %174 = vector.broadcast %172 : f32 to vector<16x16xf32>
      %175 = arith.mulf %174, %173 : vector<16x16xf32>
      %176 = arith.addf %156, %175 : vector<16x16xf32>
      %c22 = arith.constant 22 : index
      %177 = memref.load %arg4[%c22] : memref<49xf32, #tpu.memory_space<smem>>
      %178 = vector.extract_strided_slice %57 {offsets = [3, 0], sizes = [16, 16], strides = [1, 1]} : vector<22x16xf32> to vector<16x16xf32>
      %179 = vector.broadcast %177 : f32 to vector<16x16xf32>
      %180 = arith.mulf %179, %178 : vector<16x16xf32>
      %181 = arith.addf %161, %180 : vector<16x16xf32>
      %c23 = arith.constant 23 : index
      %182 = memref.load %arg4[%c23] : memref<49xf32, #tpu.memory_space<smem>>
      %183 = vector.extract_strided_slice %58 {offsets = [3, 0], sizes = [16, 16], strides = [1, 1]} : vector<22x16xf32> to vector<16x16xf32>
      %184 = vector.broadcast %182 : f32 to vector<16x16xf32>
      %185 = arith.mulf %184, %183 : vector<16x16xf32>
      %186 = arith.addf %166, %185 : vector<16x16xf32>
      %c24 = arith.constant 24 : index
      %187 = memref.load %arg4[%c24] : memref<49xf32, #tpu.memory_space<smem>>
      %188 = vector.extract_strided_slice %59 {offsets = [3, 0], sizes = [16, 16], strides = [1, 1]} : vector<22x16xf32> to vector<16x16xf32>
      %189 = vector.broadcast %187 : f32 to vector<16x16xf32>
      %190 = arith.mulf %189, %188 : vector<16x16xf32>
      %191 = arith.addf %171, %190 : vector<16x16xf32>
      %c25 = arith.constant 25 : index
      %192 = memref.load %arg4[%c25] : memref<49xf32, #tpu.memory_space<smem>>
      %193 = vector.extract_strided_slice %60 {offsets = [3, 0], sizes = [16, 16], strides = [1, 1]} : vector<22x16xf32> to vector<16x16xf32>
      %194 = vector.broadcast %192 : f32 to vector<16x16xf32>
      %195 = arith.mulf %194, %193 : vector<16x16xf32>
      %196 = arith.addf %176, %195 : vector<16x16xf32>
      %c26 = arith.constant 26 : index
      %197 = memref.load %arg4[%c26] : memref<49xf32, #tpu.memory_space<smem>>
      %198 = vector.extract_strided_slice %61 {offsets = [3, 0], sizes = [16, 16], strides = [1, 1]} : vector<22x16xf32> to vector<16x16xf32>
      %199 = vector.broadcast %197 : f32 to vector<16x16xf32>
      %200 = arith.mulf %199, %198 : vector<16x16xf32>
      %201 = arith.addf %181, %200 : vector<16x16xf32>
      %c27 = arith.constant 27 : index
      %202 = memref.load %arg4[%c27] : memref<49xf32, #tpu.memory_space<smem>>
      %203 = vector.extract_strided_slice %62 {offsets = [3, 0], sizes = [16, 16], strides = [1, 1]} : vector<22x16xf32> to vector<16x16xf32>
      %204 = vector.broadcast %202 : f32 to vector<16x16xf32>
      %205 = arith.mulf %204, %203 : vector<16x16xf32>
      %206 = arith.addf %186, %205 : vector<16x16xf32>
      %c28 = arith.constant 28 : index
      %207 = memref.load %arg4[%c28] : memref<49xf32, #tpu.memory_space<smem>>
      %208 = vector.extract_strided_slice %56 {offsets = [4, 0], sizes = [16, 16], strides = [1, 1]} : vector<22x16xf32> to vector<16x16xf32>
      %209 = vector.broadcast %207 : f32 to vector<16x16xf32>
      %210 = arith.mulf %209, %208 : vector<16x16xf32>
      %211 = arith.addf %191, %210 : vector<16x16xf32>
      %c29 = arith.constant 29 : index
      %212 = memref.load %arg4[%c29] : memref<49xf32, #tpu.memory_space<smem>>
      %213 = vector.extract_strided_slice %57 {offsets = [4, 0], sizes = [16, 16], strides = [1, 1]} : vector<22x16xf32> to vector<16x16xf32>
      %214 = vector.broadcast %212 : f32 to vector<16x16xf32>
      %215 = arith.mulf %214, %213 : vector<16x16xf32>
      %216 = arith.addf %196, %215 : vector<16x16xf32>
      %c30 = arith.constant 30 : index
      %217 = memref.load %arg4[%c30] : memref<49xf32, #tpu.memory_space<smem>>
      %218 = vector.extract_strided_slice %58 {offsets = [4, 0], sizes = [16, 16], strides = [1, 1]} : vector<22x16xf32> to vector<16x16xf32>
      %219 = vector.broadcast %217 : f32 to vector<16x16xf32>
      %220 = arith.mulf %219, %218 : vector<16x16xf32>
      %221 = arith.addf %201, %220 : vector<16x16xf32>
      %c31 = arith.constant 31 : index
      %222 = memref.load %arg4[%c31] : memref<49xf32, #tpu.memory_space<smem>>
      %223 = vector.extract_strided_slice %59 {offsets = [4, 0], sizes = [16, 16], strides = [1, 1]} : vector<22x16xf32> to vector<16x16xf32>
      %224 = vector.broadcast %222 : f32 to vector<16x16xf32>
      %225 = arith.mulf %224, %223 : vector<16x16xf32>
      %226 = arith.addf %206, %225 : vector<16x16xf32>
      %c32 = arith.constant 32 : index
      %227 = memref.load %arg4[%c32] : memref<49xf32, #tpu.memory_space<smem>>
      %228 = vector.extract_strided_slice %60 {offsets = [4, 0], sizes = [16, 16], strides = [1, 1]} : vector<22x16xf32> to vector<16x16xf32>
      %229 = vector.broadcast %227 : f32 to vector<16x16xf32>
      %230 = arith.mulf %229, %228 : vector<16x16xf32>
      %231 = arith.addf %211, %230 : vector<16x16xf32>
      %c33 = arith.constant 33 : index
      %232 = memref.load %arg4[%c33] : memref<49xf32, #tpu.memory_space<smem>>
      %233 = vector.extract_strided_slice %61 {offsets = [4, 0], sizes = [16, 16], strides = [1, 1]} : vector<22x16xf32> to vector<16x16xf32>
      %234 = vector.broadcast %232 : f32 to vector<16x16xf32>
      %235 = arith.mulf %234, %233 : vector<16x16xf32>
      %236 = arith.addf %216, %235 : vector<16x16xf32>
      %c34 = arith.constant 34 : index
      %237 = memref.load %arg4[%c34] : memref<49xf32, #tpu.memory_space<smem>>
      %238 = vector.extract_strided_slice %62 {offsets = [4, 0], sizes = [16, 16], strides = [1, 1]} : vector<22x16xf32> to vector<16x16xf32>
      %239 = vector.broadcast %237 : f32 to vector<16x16xf32>
      %240 = arith.mulf %239, %238 : vector<16x16xf32>
      %241 = arith.addf %221, %240 : vector<16x16xf32>
      %c35 = arith.constant 35 : index
      %242 = memref.load %arg4[%c35] : memref<49xf32, #tpu.memory_space<smem>>
      %243 = vector.extract_strided_slice %56 {offsets = [5, 0], sizes = [16, 16], strides = [1, 1]} : vector<22x16xf32> to vector<16x16xf32>
      %244 = vector.broadcast %242 : f32 to vector<16x16xf32>
      %245 = arith.mulf %244, %243 : vector<16x16xf32>
      %246 = arith.addf %226, %245 : vector<16x16xf32>
      %c36 = arith.constant 36 : index
      %247 = memref.load %arg4[%c36] : memref<49xf32, #tpu.memory_space<smem>>
      %248 = vector.extract_strided_slice %57 {offsets = [5, 0], sizes = [16, 16], strides = [1, 1]} : vector<22x16xf32> to vector<16x16xf32>
      %249 = vector.broadcast %247 : f32 to vector<16x16xf32>
      %250 = arith.mulf %249, %248 : vector<16x16xf32>
      %251 = arith.addf %231, %250 : vector<16x16xf32>
      %c37 = arith.constant 37 : index
      %252 = memref.load %arg4[%c37] : memref<49xf32, #tpu.memory_space<smem>>
      %253 = vector.extract_strided_slice %58 {offsets = [5, 0], sizes = [16, 16], strides = [1, 1]} : vector<22x16xf32> to vector<16x16xf32>
      %254 = vector.broadcast %252 : f32 to vector<16x16xf32>
      %255 = arith.mulf %254, %253 : vector<16x16xf32>
      %256 = arith.addf %236, %255 : vector<16x16xf32>
      %c38 = arith.constant 38 : index
      %257 = memref.load %arg4[%c38] : memref<49xf32, #tpu.memory_space<smem>>
      %258 = vector.extract_strided_slice %59 {offsets = [5, 0], sizes = [16, 16], strides = [1, 1]} : vector<22x16xf32> to vector<16x16xf32>
      %259 = vector.broadcast %257 : f32 to vector<16x16xf32>
      %260 = arith.mulf %259, %258 : vector<16x16xf32>
      %261 = arith.addf %241, %260 : vector<16x16xf32>
      %c39 = arith.constant 39 : index
      %262 = memref.load %arg4[%c39] : memref<49xf32, #tpu.memory_space<smem>>
      %263 = vector.extract_strided_slice %60 {offsets = [5, 0], sizes = [16, 16], strides = [1, 1]} : vector<22x16xf32> to vector<16x16xf32>
      %264 = vector.broadcast %262 : f32 to vector<16x16xf32>
      %265 = arith.mulf %264, %263 : vector<16x16xf32>
      %266 = arith.addf %246, %265 : vector<16x16xf32>
      %c40 = arith.constant 40 : index
      %267 = memref.load %arg4[%c40] : memref<49xf32, #tpu.memory_space<smem>>
      %268 = vector.extract_strided_slice %61 {offsets = [5, 0], sizes = [16, 16], strides = [1, 1]} : vector<22x16xf32> to vector<16x16xf32>
      %269 = vector.broadcast %267 : f32 to vector<16x16xf32>
      %270 = arith.mulf %269, %268 : vector<16x16xf32>
      %271 = arith.addf %251, %270 : vector<16x16xf32>
      %c41 = arith.constant 41 : index
      %272 = memref.load %arg4[%c41] : memref<49xf32, #tpu.memory_space<smem>>
      %273 = vector.extract_strided_slice %62 {offsets = [5, 0], sizes = [16, 16], strides = [1, 1]} : vector<22x16xf32> to vector<16x16xf32>
      %274 = vector.broadcast %272 : f32 to vector<16x16xf32>
      %275 = arith.mulf %274, %273 : vector<16x16xf32>
      %276 = arith.addf %256, %275 : vector<16x16xf32>
      %c42 = arith.constant 42 : index
      %277 = memref.load %arg4[%c42] : memref<49xf32, #tpu.memory_space<smem>>
      %278 = vector.extract_strided_slice %56 {offsets = [6, 0], sizes = [16, 16], strides = [1, 1]} : vector<22x16xf32> to vector<16x16xf32>
      %279 = vector.broadcast %277 : f32 to vector<16x16xf32>
      %280 = arith.mulf %279, %278 : vector<16x16xf32>
      %281 = arith.addf %261, %280 : vector<16x16xf32>
      %c43 = arith.constant 43 : index
      %282 = memref.load %arg4[%c43] : memref<49xf32, #tpu.memory_space<smem>>
      %283 = vector.extract_strided_slice %57 {offsets = [6, 0], sizes = [16, 16], strides = [1, 1]} : vector<22x16xf32> to vector<16x16xf32>
      %284 = vector.broadcast %282 : f32 to vector<16x16xf32>
      %285 = arith.mulf %284, %283 : vector<16x16xf32>
      %286 = arith.addf %266, %285 : vector<16x16xf32>
      %c44 = arith.constant 44 : index
      %287 = memref.load %arg4[%c44] : memref<49xf32, #tpu.memory_space<smem>>
      %288 = vector.extract_strided_slice %58 {offsets = [6, 0], sizes = [16, 16], strides = [1, 1]} : vector<22x16xf32> to vector<16x16xf32>
      %289 = vector.broadcast %287 : f32 to vector<16x16xf32>
      %290 = arith.mulf %289, %288 : vector<16x16xf32>
      %291 = arith.addf %271, %290 : vector<16x16xf32>
      %c45 = arith.constant 45 : index
      %292 = memref.load %arg4[%c45] : memref<49xf32, #tpu.memory_space<smem>>
      %293 = vector.extract_strided_slice %59 {offsets = [6, 0], sizes = [16, 16], strides = [1, 1]} : vector<22x16xf32> to vector<16x16xf32>
      %294 = vector.broadcast %292 : f32 to vector<16x16xf32>
      %295 = arith.mulf %294, %293 : vector<16x16xf32>
      %296 = arith.addf %276, %295 : vector<16x16xf32>
      %c46 = arith.constant 46 : index
      %297 = memref.load %arg4[%c46] : memref<49xf32, #tpu.memory_space<smem>>
      %298 = vector.extract_strided_slice %60 {offsets = [6, 0], sizes = [16, 16], strides = [1, 1]} : vector<22x16xf32> to vector<16x16xf32>
      %299 = vector.broadcast %297 : f32 to vector<16x16xf32>
      %300 = arith.mulf %299, %298 : vector<16x16xf32>
      %301 = arith.addf %281, %300 : vector<16x16xf32>
      %c47 = arith.constant 47 : index
      %302 = memref.load %arg4[%c47] : memref<49xf32, #tpu.memory_space<smem>>
      %303 = vector.extract_strided_slice %61 {offsets = [6, 0], sizes = [16, 16], strides = [1, 1]} : vector<22x16xf32> to vector<16x16xf32>
      %304 = vector.broadcast %302 : f32 to vector<16x16xf32>
      %305 = arith.mulf %304, %303 : vector<16x16xf32>
      %306 = arith.addf %286, %305 : vector<16x16xf32>
      %c48 = arith.constant 48 : index
      %307 = memref.load %arg4[%c48] : memref<49xf32, #tpu.memory_space<smem>>
      %308 = vector.extract_strided_slice %62 {offsets = [6, 0], sizes = [16, 16], strides = [1, 1]} : vector<22x16xf32> to vector<16x16xf32>
      %309 = vector.broadcast %307 : f32 to vector<16x16xf32>
      %310 = arith.mulf %309, %308 : vector<16x16xf32>
      %311 = arith.addf %291, %310 : vector<16x16xf32>
      %312 = arith.addf %311, %296 : vector<16x16xf32>
      %313 = arith.addf %301, %306 : vector<16x16xf32>
      %314 = arith.addf %312, %313 : vector<16x16xf32>
      %315 = arith.index_cast %arg1 : i32 to index
      %c0_37 = arith.constant 0 : index
      %c0_38 = arith.constant 0 : index
      %316 = vector.load %arg8[%315, %c0_37, %c0_38] : memref<2x16x16xf32, #tpu.memory_space<vmem>>, vector<1x16x16xf32>
      %317 = vector.shape_cast %316 : vector<1x16x16xf32> to vector<16x16xf32>
      %318 = vector.shape_cast %314 : vector<16x16xf32> to vector<1x16x16xf32>
      tpu.vector_store %arg8[%315, %c0_37, %c0_38], %318 {strides = array<i32>} : memref<2x16x16xf32, #tpu.memory_space<vmem>>, vector<1x16x16xf32>,
      %c0_i32_39 = arith.constant 0 : i32
      %319 = arith.cmpi eq, %arg1, %c0_i32_39 : i32
      %320 = arith.extui %319 : i1 to i32
      %c0_i32_40 = arith.constant 0 : i32
      %321 = arith.cmpi ne, %320, %c0_i32_40 : i32
      scf.if %321 {
        %336 = vector.extract_strided_slice %314 {offsets = [0, 0], sizes = [1, 1], strides = [1, 1]} : vector<16x16xf32> to vector<1x1xf32>
        %c0_53 = arith.constant 0 : index
        %c0_54 = arith.constant 0 : index
        %337 = vector.load %arg15[%c0_53, %c0_54] : memref<1x1xf32, #tpu.memory_space<vmem>>, vector<1x1xf32>
        tpu.vector_store %arg15[%c0_53, %c0_54], %336 {strides = array<i32>} : memref<1x1xf32, #tpu.memory_space<vmem>>, vector<1x1xf32>,
      } else {
      }
      %c0_41 = arith.constant 0 : index
      %c0_42 = arith.constant 0 : index
      %322 = vector.load %arg15[%c0_41, %c0_42] : memref<1x1xf32, #tpu.memory_space<vmem>>, vector<1x1xf32>
      %323 = vector.broadcast %322 : vector<1x1xf32> to vector<16x16xf32>
      %324 = arith.subf %314, %323 : vector<16x16xf32>
      %c0_43 = arith.constant 0 : index
      %c0_44 = arith.constant 0 : index
      %325 = vector.load %arg13[%c0_43, %c0_44] : memref<1x16xf32, #tpu.memory_space<vmem>>, vector<1x16xf32>
      %cst_45 = arith.constant dense<0.000000e+00> : vector<16xf32>
      %326 = vector.multi_reduction <add>, %324, %cst_45 [0] : vector<16x16xf32> to vector<16xf32>
      %327 = vector.shape_cast %326 : vector<16xf32> to vector<1x16xf32>
      %328 = arith.addf %325, %327 : vector<1x16xf32>
      %c0_46 = arith.constant 0 : index
      %c0_47 = arith.constant 0 : index
      %329 = vector.load %arg13[%c0_46, %c0_47] : memref<1x16xf32, #tpu.memory_space<vmem>>, vector<1x16xf32>
      tpu.vector_store %arg13[%c0_46, %c0_47], %328 {strides = array<i32>} : memref<1x16xf32, #tpu.memory_space<vmem>>, vector<1x16xf32>,
      %c0_48 = arith.constant 0 : index
      %c0_49 = arith.constant 0 : index
      %330 = vector.load %arg14[%c0_48, %c0_49] : memref<1x16xf32, #tpu.memory_space<vmem>>, vector<1x16xf32>
      %331 = arith.mulf %324, %324 : vector<16x16xf32>
      %cst_50 = arith.constant dense<0.000000e+00> : vector<16xf32>
      %332 = vector.multi_reduction <add>, %331, %cst_50 [0] : vector<16x16xf32> to vector<16xf32>
      %333 = vector.shape_cast %332 : vector<16xf32> to vector<1x16xf32>
      %334 = arith.addf %330, %333 : vector<1x16xf32>
      %c0_51 = arith.constant 0 : index
      %c0_52 = arith.constant 0 : index
      %335 = vector.load %arg14[%c0_51, %c0_52] : memref<1x16xf32, #tpu.memory_space<vmem>>, vector<1x16xf32>
      tpu.vector_store %arg14[%c0_51, %c0_52], %334 {strides = array<i32>} : memref<1x16xf32, #tpu.memory_space<vmem>>, vector<1x16xf32>,
    } else {
    }
    %c1_i32 = arith.constant 1 : i32
    %15 = arith.cmpi eq, %arg0, %c1_i32 : i32
    %c0_i32_8 = arith.constant 0 : i32
    %16 = arith.cmpi eq, %arg1, %c0_i32_8 : i32
    %c0_i32_9 = arith.constant 0 : i32
    %17 = arith.cmpi eq, %arg2, %c0_i32_9 : i32
    %18 = arith.andi %16, %17 : i1
    %19 = arith.andi %15, %18 : i1
    %20 = arith.extui %19 : i1 to i32
    %c0_i32_10 = arith.constant 0 : i32
    %21 = arith.cmpi ne, %20, %c0_i32_10 : i32
    scf.if %21 {
      %c0 = arith.constant 0 : index
      %c0_16 = arith.constant 0 : index
      %30 = vector.load %arg13[%c0, %c0_16] : memref<1x16xf32, #tpu.memory_space<vmem>>, vector<1x16xf32>
      %cst = arith.constant dense<0.000000e+00> : vector<1xf32>
      %31 = vector.multi_reduction <add>, %30, %cst [1] : vector<1x16xf32> to vector<1xf32>
      %32 = vector.shape_cast %31 : vector<1xf32> to vector<1x1xf32>
      %c0_17 = arith.constant 0 : index
      %c0_18 = arith.constant 0 : index
      %33 = vector.load %arg14[%c0_17, %c0_18] : memref<1x16xf32, #tpu.memory_space<vmem>>, vector<1x16xf32>
      %cst_19 = arith.constant dense<0.000000e+00> : vector<1xf32>
      %34 = vector.multi_reduction <add>, %33, %cst_19 [1] : vector<1x16xf32> to vector<1xf32>
      %35 = vector.shape_cast %34 : vector<1xf32> to vector<1x1xf32>
      %cst_20 = arith.constant 0.001953125 : f32
      %36 = vector.broadcast %cst_20 : f32 to vector<1x1xf32>
      %37 = arith.mulf %32, %36 : vector<1x1xf32>
      %cst_21 = arith.constant 0.001953125 : f32
      %38 = vector.broadcast %cst_21 : f32 to vector<1x1xf32>
      %39 = arith.mulf %35, %38 : vector<1x1xf32>
      %40 = arith.mulf %37, %37 : vector<1x1xf32>
      %41 = arith.subf %39, %40 : vector<1x1xf32>
      %cst_22 = arith.constant 0.000000e+00 : f32
      %42 = vector.broadcast %cst_22 : f32 to vector<1x1xf32>
      %43 = arith.maximumf %41, %42 : vector<1x1xf32>
      %c0_23 = arith.constant 0 : index
      %c0_24 = arith.constant 0 : index
      %44 = vector.load %arg15[%c0_23, %c0_24] : memref<1x1xf32, #tpu.memory_space<vmem>>, vector<1x1xf32>
      %45 = arith.addf %44, %37 : vector<1x1xf32>
      %cst_25 = arith.constant 9.99999974E-6 : f32
      %46 = vector.broadcast %cst_25 : f32 to vector<1x1xf32>
      %47 = arith.addf %43, %46 : vector<1x1xf32>
      %48 = math.rsqrt %47 : vector<1x1xf32>
      %c0_26 = arith.constant 0 : index
      %49 = memref.load %arg6[%c0_26] : memref<2xf32, #tpu.memory_space<smem>>
      %c1 = arith.constant 1 : index
      %50 = memref.load %arg6[%c1] : memref<2xf32, #tpu.memory_space<smem>>
      %51 = vector.broadcast %49 : f32 to vector<1x1xf32>
      %52 = arith.mulf %51, %48 : vector<1x1xf32>
      %c0_27 = arith.constant 0 : index
      %c0_28 = arith.constant 0 : index
      %53 = vector.load %arg16[%c0_27, %c0_28] : memref<1x1xf32, #tpu.memory_space<vmem>>, vector<1x1xf32>
      tpu.vector_store %arg16[%c0_27, %c0_28], %52 {strides = array<i32>} : memref<1x1xf32, #tpu.memory_space<vmem>>, vector<1x1xf32>,
      %54 = vector.broadcast %49 : f32 to vector<1x1xf32>
      %55 = arith.mulf %54, %48 : vector<1x1xf32>
      %56 = arith.mulf %45, %55 : vector<1x1xf32>
      %57 = vector.broadcast %50 : f32 to vector<1x1xf32>
      %58 = arith.subf %57, %56 : vector<1x1xf32>
      %c0_29 = arith.constant 0 : index
      %c0_30 = arith.constant 0 : index
      %59 = vector.load %arg17[%c0_29, %c0_30] : memref<1x1xf32, #tpu.memory_space<vmem>>, vector<1x1xf32>
      tpu.vector_store %arg17[%c0_29, %c0_30], %58 {strides = array<i32>} : memref<1x1xf32, #tpu.memory_space<vmem>>, vector<1x1xf32>,
    } else {
    }
    %c1_i32_11 = arith.constant 1 : i32
    %22 = arith.cmpi eq, %arg0, %c1_i32_11 : i32
    %c0_i32_12 = arith.constant 0 : i32
    %23 = arith.cmpi eq, %arg2, %c0_i32_12 : i32
    %24 = arith.andi %22, %23 : i1
    %25 = arith.extui %24 : i1 to i32
    %c0_i32_13 = arith.constant 0 : i32
    %26 = arith.cmpi ne, %25, %c0_i32_13 : i32
    scf.if %26 {
      %30 = arith.index_cast %arg1 : i32 to index
      %c0 = arith.constant 0 : index
      %c0_16 = arith.constant 0 : index
      %31 = vector.load %arg8[%30, %c0, %c0_16] : memref<2x16x16xf32, #tpu.memory_space<vmem>>, vector<1x16x16xf32>
      %32 = vector.shape_cast %31 : vector<1x16x16xf32> to vector<16x16xf32>
      %c0_17 = arith.constant 0 : index
      %c0_18 = arith.constant 0 : index
      %33 = vector.load %arg16[%c0_17, %c0_18] : memref<1x1xf32, #tpu.memory_space<vmem>>, vector<1x1xf32>
      %34 = vector.broadcast %33 : vector<1x1xf32> to vector<16x16xf32>
      %35 = arith.mulf %32, %34 : vector<16x16xf32>
      %c0_19 = arith.constant 0 : index
      %c0_20 = arith.constant 0 : index
      %36 = vector.load %arg17[%c0_19, %c0_20] : memref<1x1xf32, #tpu.memory_space<vmem>>, vector<1x1xf32>
      %37 = vector.broadcast %36 : vector<1x1xf32> to vector<16x16xf32>
      %38 = arith.addf %35, %37 : vector<16x16xf32>
      %cst = arith.constant 0.000000e+00 : f32
      %39 = vector.broadcast %cst : f32 to vector<16x16xf32>
      %40 = arith.subf %39, %38 : vector<16x16xf32>
      %41 = math.exp %40 : vector<16x16xf32>
      %cst_21 = arith.constant 1.000000e+00 : f32
      %42 = vector.broadcast %cst_21 : f32 to vector<16x16xf32>
      %43 = arith.addf %42, %41 : vector<16x16xf32>
      %cst_22 = arith.constant 1.000000e+00 : f32
      %44 = vector.broadcast %cst_22 : f32 to vector<16x16xf32>
      %45 = arith.divf %44, %43 : vector<16x16xf32>
      %c0_23 = arith.constant 0 : index
      %c0_24 = arith.constant 0 : index
      %46 = vector.load %arg18[%c0_23, %c0_24] : memref<16x16xf32, #tpu.memory_space<vmem>>, vector<16x16xf32>
      tpu.vector_store %arg18[%c0_23, %c0_24], %45 {strides = array<i32>} : memref<16x16xf32, #tpu.memory_space<vmem>>, vector<16x16xf32>,
    } else {
    }
    %c1_i32_14 = arith.constant 1 : i32
    %27 = arith.cmpi eq, %arg0, %c1_i32_14 : i32
    %28 = arith.extui %27 : i1 to i32
    %c0_i32_15 = arith.constant 0 : i32
    %29 = arith.cmpi ne, %28, %c0_i32_15 : i32
    scf.if %29 {
      %c0 = arith.constant 0 : index
      %c0_16 = arith.constant 0 : index
      %c0_17 = arith.constant 0 : index
      %c0_18 = arith.constant 0 : index
      %30 = vector.load %arg3[%c0, %c0_16, %c0_17, %c0_18] : memref<1x4x16x16xf32, #tpu.memory_space<vmem>>, vector<1x4x16x16xf32>
      %31 = vector.shape_cast %30 : vector<1x4x16x16xf32> to vector<4x16x16xf32>
      %c0_19 = arith.constant 0 : index
      %c0_20 = arith.constant 0 : index
      %32 = vector.load %arg18[%c0_19, %c0_20] : memref<16x16xf32, #tpu.memory_space<vmem>>, vector<16x16xf32>
      %33 = vector.shape_cast %32 : vector<16x16xf32> to vector<1x16x16xf32>
      %34 = vector.broadcast %33 : vector<1x16x16xf32> to vector<4x16x16xf32>
      %35 = arith.mulf %31, %34 : vector<4x16x16xf32>
      %c0_21 = arith.constant 0 : index
      %c0_22 = arith.constant 0 : index
      %c0_23 = arith.constant 0 : index
      %c0_24 = arith.constant 0 : index
      %36 = vector.load %arg7[%c0_21, %c0_22, %c0_23, %c0_24] : memref<1x4x16x16xf32, #tpu.memory_space<vmem>>, vector<1x4x16x16xf32>
      %37 = vector.shape_cast %36 : vector<1x4x16x16xf32> to vector<4x16x16xf32>
      %38 = vector.shape_cast %35 : vector<4x16x16xf32> to vector<1x4x16x16xf32>
      tpu.vector_store %arg7[%c0_21, %c0_22, %c0_23, %c0_24], %38 {strides = array<i32>} : memref<1x4x16x16xf32, #tpu.memory_space<vmem>>, vector<1x4x16x16xf32>,
    } else {
    }
    return
  }
  func.func @transform_0(%arg0: i32, %arg1: i32, %arg2: i32) -> (i32, i32, i32, i32) {
    %c0_i32 = arith.constant 0 : i32
    %c0_i32_0 = arith.constant 0 : i32
    %c0_i32_1 = arith.constant 0 : i32
    return %arg1, %arg2, %c0_i32, %c0_i32_0 : i32, i32, i32, i32
  }
  func.func @transform_1(%arg0: i32, %arg1: i32, %arg2: i32) -> i32 {
    %c0_i32 = arith.constant 0 : i32
    %c0_i32_0 = arith.constant 0 : i32
    return %c0_i32 : i32
  }
  func.func @transform_2(%arg0: i32, %arg1: i32, %arg2: i32) -> i32 {
    %c0_i32 = arith.constant 0 : i32
    %c0_i32_0 = arith.constant 0 : i32
    return %c0_i32 : i32
  }
  func.func @transform_3(%arg0: i32, %arg1: i32, %arg2: i32) -> i32 {
    %c0_i32 = arith.constant 0 : i32
    %c0_i32_0 = arith.constant 0 : i32
    return %c0_i32 : i32
  }
  func.func @transform_4(%arg0: i32, %arg1: i32, %arg2: i32) -> (i32, i32, i32, i32) {
    %0 = arith.muli %arg0, %arg1 : i32
    %1 = arith.muli %arg0, %arg2 : i32
    %c0_i32 = arith.constant 0 : i32
    %c0_i32_0 = arith.constant 0 : i32
    %c0_i32_1 = arith.constant 0 : i32
    return %0, %1, %c0_i32, %c0_i32_0 : i32, i32, i32, i32
  }
}

</mosaic_0001>

<llo_original>
// kernel: tpu_custom_call.1
$region0: #{tpu_custom_call.1}
  #allocation0 [shape = 'u32[]', space=smem, size = 0x4, offset = 0x4, fixed_abs, tag = 'smem constant byte address 0x4 - core index']
  #allocation1 [shape = 'u32[144,128]{1,0:T(1,128)}', space=vmem, size = 0x12000, scoped, tag = 'internal scratch']
  #allocation2 [shape = 'f32[2,16,16]{2,1,0:T(8,128)}', space=vmem, size = 0x4000, scoped, tag = 'scratch operand']
  #allocation3 [shape = 'f32[16,16]{1,0:T(8,128)}', space=vmem, size = 0x2000, scoped, tag = 'scratch operand']
  #allocation4 [shape = 'f32[16,16]{1,0:T(8,128)}', space=vmem, size = 0x2000, scoped, tag = 'scratch operand']
  #allocation5 [shape = 'f32[16,16]{1,0:T(8,128)}', space=vmem, size = 0x2000, scoped, tag = 'scratch operand']
  #allocation6 [shape = 'f32[22,22]{1,0:T(8,128)}', space=vmem, size = 0x3000, scoped, tag = 'scratch operand']
  #allocation7 [shape = 'f32[1,16]{1,0:T(1,128)}', space=vmem, size = 0x200, scoped, tag = 'scratch operand']
  #allocation8 [shape = 'f32[1,16]{1,0:T(1,128)}', space=vmem, size = 0x200, scoped, tag = 'scratch operand']
  #allocation9 [shape = 'f32[1,1]{1,0:T(1,128)}', space=vmem, size = 0x200, scoped, tag = 'scratch operand']
  #allocation10 [shape = 'f32[1,1]{1,0:T(1,128)}', space=vmem, size = 0x200, scoped, tag = 'scratch operand']
  #allocation11 [shape = 'f32[1,1]{1,0:T(1,128)}', space=vmem, size = 0x200, scoped, tag = 'scratch operand']
  #allocation12 [shape = 'f32[16,16]{1,0:T(8,128)}', space=vmem, size = 0x2000, scoped, tag = 'scratch operand']
  %s0 = inlined_call_operand.hbm [shape: f32[2,4,16,16], index: 0, kind: input, shape index: {}]
  %s1 = inlined_call_operand.vmem [shape: f32[49], index: 1, kind: input, shape index: {}]
  %s2 = inlined_call_operand.vmem [shape: f32[2], index: 2, kind: input, shape index: {}]
  %s3 = inlined_call_operand.vmem [shape: f32[2], index: 3, kind: input, shape index: {}]
  %s4 = inlined_call_operand.hbm [shape: f32[2,4,16,16], index: 4, kind: output, shape index: {}]
  %s5 = sld [smem:[#allocation0]]
  $region97: #{tpu_custom_call.1} parent=0
    _
  %s7 = ssub.s32 1, %s5
  %s8 = scalar_select 0, %s7, %s5
  $region1: #{tpu_custom_call.1} parent=0
    #allocation13 [shape = 'u8[65536]{0}', space=vmem, size = 0x10000, scoped, tag = 'input window, operand 0']
    #allocation14 [shape = 's32[2]{0}', space=sflag, size = 0x8, scoped, tag = 'scoped memory for tpu_custom_call.1']
    #allocation15 [shape = 's32[2]{0}', space=sflag, size = 0x8, scoped, tag = 'scoped memory for tpu_custom_call.1']
    #allocation16 [shape = 's32[2]{0}', space=sflag, size = 0x8, scoped, tag = 'scoped memory for tpu_custom_call.1']
    #allocation17 [shape = 'u8[512]{0}', space=smem, size = 0x200, scoped, tag = 'input window, operand 1, single buffered']
    #allocation18 [shape = 'u8[512]{0}', space=smem, size = 0x200, scoped, tag = 'input window, operand 2, single buffered']
    #allocation19 [shape = 's32[1]{0}', space=sflag, size = 0x4, scoped, tag = 'scoped memory for tpu_custom_call.1']
    #allocation20 [shape = 'u8[512]{0}', space=smem, size = 0x200, scoped, tag = 'input window, operand 3, single buffered']
    #allocation21 [shape = 'u8[65536]{0}', space=vmem, size = 0x10000, scoped, tag = 'output window, operand 0']
    %9 = vsyncpa [#allocation14], 0
    %s10 = scalar_lea.sflag [#allocation14], 1
    %11 = vsyncpa %s10, 0
    %12 = vsyncpa [#allocation16], 0
    %13 = vsyncpa [#allocation19], 0
    %14 = vsyncpa [#allocation15], 0
    %s15 = scalar_lea.sflag [#allocation15], 1
    %16 = vsyncpa %s15, 0
    loop: start=0, step=1, limit=6
    $region2: #{tpu_custom_call.1} parent=1 // loop_pre_header
      _
    $region3: #{tpu_custom_call.1} parent=1 // loop_header
      %s18 = sphi 0, %s22
      %p19 = scmp.ge.s32.totalorder %s18, 6
      %s25 = sphi 0, %s44
      %s26 = sphi 0, %s40
      %s27 = sphi 0, %s36
      %s28 = sphi 0, %s25
      %s29 = sphi 0, %s26
      %s30 = sphi 0, %s27
      %s31 = sphi 0, %s28
      %s32 = sphi 0, %s29
      %s33 = sphi 0, %s30
      %s49 = sphi 0, %s51
      %s52 = sphi 0, %s49
      %s53 = sphi 0, %s52
      %s69 = sphi 0, %s53
      %s73 = sphi 0, %s73
      %s75 = sphi 0, %s73
      %s76 = sphi 0, %s75
      %s90 = sphi 0, %s76
      %s94 = sphi 0, %s94
      %s96 = sphi 0, %s94
      %s97 = sphi 0, %s96
      %s111 = sphi 0, %s97
      %s115 = sphi 0, %s115
      %s117 = sphi 0, %s115
      %s118 = sphi 0, %s117
      %s132 = sphi 0, %s118
      %s144 = sphi 0, %s146
      %s147 = sphi 0, %s144
      %s148 = sphi 0, %s147
      %s164 = sphi 0, %s148
    $region4: #{tpu_custom_call.1} parent=1 // loop_header_branch
      %21 = sbr.rel (%p19) target = $region8
    $region5: #{tpu_custom_call.1} parent=1 // loop_body
      %s23 = ssub.s32 %s18, 1
      %s24 = ssub.s32 %s18, 2
      %s34 = sadd.s32 1, %s27
      %p35 = scmp.ge.s32.totalorder %s34, 1
      %s36 = scalar_select %p35, 0, %s34
      %s37 = sadd.s32 1, %s26
      %s38 = scalar_select %p35, %s37, %s26
      %p39 = scmp.ge.s32.totalorder %s38, 2
      %s40 = scalar_select %p39, 0, %s38
      %s41 = sadd.s32 1, %s25
      %s42 = scalar_select %p39, %s41, %s25
      %p43 = scmp.ge.s32.totalorder %s42, 2
      %s44 = scalar_select %p43, 0, %s42
      %s45 = ssub.s32 %s26, %s40
      %s46 = ssub.s32 %s27, %s36
      %s47 = sor.u32 %s45, %s46
      %p48 = scmp.eq.s32.totalorder %s47, 0
      %s50 = sadd.s32 %s49, 1
      %s51 = scalar_select %p48, %s49, %s50
      %p54 = pneg %p48
      %p55 = scmp.eq.s32.totalorder %s18, 3
      %p56 = por %p54, %p55
      %p57 = scmp.ne.s32.totalorder %s49, %s52
      %p58 = scmp.eq.s32.totalorder %s18, 0
      %p59 = por %p57, %p58
      %p60 = scmp.ne.s32.totalorder %s49, %s52
      %p61 = scmp.eq.s32.totalorder %s23, 3
      %p62 = por %p60, %p61
      %p63 = scmp.ne.s32.totalorder %s52, %s53
      %p64 = scmp.eq.s32.totalorder %s23, 0
      %p65 = por %p63, %p64
      %p66 = scmp.ne.s32.totalorder %s52, %s53
      %p67 = scmp.eq.s32.totalorder %s24, 3
      %p68 = por %p66, %p67
      %p70 = scmp.ne.s32.totalorder %s53, %s69
      %p71 = scmp.eq.s32.totalorder %s24, 0
      %p72 = por %p70, %p71
      %s74 = sadd.s32 %s73, 1
      %p77 = scmp.eq.s32.totalorder %s18, 3
      %p78 = scmp.ne.s32.totalorder %s73, %s75
      %p79 = scmp.eq.s32.totalorder %s18, 0
      %p80 = por %p78, %p79
      %p81 = scmp.ne.s32.totalorder %s73, %s75
      %p82 = scmp.eq.s32.totalorder %s23, 3
      %p83 = por %p81, %p82
      %p84 = scmp.ne.s32.totalorder %s75, %s76
      %p85 = scmp.eq.s32.totalorder %s23, 0
      %p86 = por %p84, %p85
      %p87 = scmp.ne.s32.totalorder %s75, %s76
      %p88 = scmp.eq.s32.totalorder %s24, 3
      %p89 = por %p87, %p88
      %p91 = scmp.ne.s32.totalorder %s76, %s90
      %p92 = scmp.eq.s32.totalorder %s24, 0
      %p93 = por %p91, %p92
      %s95 = sadd.s32 %s94, 1
      %p98 = scmp.eq.s32.totalorder %s18, 3
      %p99 = scmp.ne.s32.totalorder %s94, %s96
      %p100 = scmp.eq.s32.totalorder %s18, 0
      %p101 = por %p99, %p100
      %p102 = scmp.ne.s32.totalorder %s94, %s96
      %p103 = scmp.eq.s32.totalorder %s23, 3
      %p104 = por %p102, %p103
      %p105 = scmp.ne.s32.totalorder %s96, %s97
      %p106 = scmp.eq.s32.totalorder %s23, 0
      %p107 = por %p105, %p106
      %p108 = scmp.ne.s32.totalorder %s96, %s97
      %p109 = scmp.eq.s32.totalorder %s24, 3
      %p110 = por %p108, %p109
      %p112 = scmp.ne.s32.totalorder %s97, %s111
      %p113 = scmp.eq.s32.totalorder %s24, 0
      %p114 = por %p112, %p113
      %s116 = sadd.s32 %s115, 1
      %p119 = scmp.eq.s32.totalorder %s18, 3
      %p120 = scmp.ne.s32.totalorder %s115, %s117
      %p121 = scmp.eq.s32.totalorder %s18, 0
      %p122 = por %p120, %p121
      %p123 = scmp.ne.s32.totalorder %s115, %s117
      %p124 = scmp.eq.s32.totalorder %s23, 3
      %p125 = por %p123, %p124
      %p126 = scmp.ne.s32.totalorder %s117, %s118
      %p127 = scmp.eq.s32.totalorder %s23, 0
      %p128 = por %p126, %p127
      %p129 = scmp.ne.s32.totalorder %s117, %s118
      %p130 = scmp.eq.s32.totalorder %s24, 3
      %p131 = por %p129, %p130
      %p133 = scmp.ne.s32.totalorder %s118, %s132
      %p134 = scmp.eq.s32.totalorder %s24, 0
      %p135 = por %p133, %p134
      %s136 = smul.u32 %s25, %s26
      %s137 = smul.u32 %s25, %s27
      %s138 = smul.u32 %s44, %s40
      %s139 = smul.u32 %s44, %s36
      %s140 = ssub.s32 %s136, %s138
      %s141 = ssub.s32 %s137, %s139
      %s142 = sor.u32 %s140, %s141
      %p143 = scmp.eq.s32.totalorder %s142, 0
      %s145 = sadd.s32 %s144, 1
      %s146 = scalar_select %p143, %s144, %s145
      %p149 = pneg %p143
      %p150 = scmp.eq.s32.totalorder %s18, 3
      %p151 = por %p149, %p150
      %p152 = scmp.ne.s32.totalorder %s144, %s147
      %p153 = scmp.eq.s32.totalorder %s18, 0
      %p154 = por %p152, %p153
      %p155 = scmp.ne.s32.totalorder %s144, %s147
      %p156 = scmp.eq.s32.totalorder %s23, 3
      %p157 = por %p155, %p156
      %p158 = scmp.ne.s32.totalorder %s147, %s148
      %p159 = scmp.eq.s32.totalorder %s23, 0
      %p160 = por %p158, %p159
      %p161 = scmp.ne.s32.totalorder %s147, %s148
      %p162 = scmp.eq.s32.totalorder %s24, 3
      %p163 = por %p161, %p162
      %p165 = scmp.ne.s32.totalorder %s148, %s164
      %p166 = scmp.eq.s32.totalorder %s24, 0
      %p167 = por %p165, %p166
      %p168 = scmp.le.s32.totalorder 1, %s18
      %p169 = scmp.lt.s32.totalorder %s18, 5
      %p170 = pnand %p168, %p169
      %p171 = pneg %p170
      // Predicated region
      $region9: #{tpu_custom_call.1} parent=5 // pred_check
        _
      $region10: #{tpu_custom_call.1} parent=5 // pred_check_branch
        %173 = sbr.rel (%p170) target = $region12
      $region11: #{tpu_custom_call.1} parent=5 // pred_region
        %s174 = ssub.s32 %s18, 1
        // Predicated region
        $region13: #{tpu_custom_call.1} parent=11 // pred_check
          %p175 = pneg %p86
        $region14: #{tpu_custom_call.1} parent=11 // pred_check_branch
          %177 = sbr.rel (%p175) target = $region16
        $region15: #{tpu_custom_call.1} parent=11 // pred_region
          %s179 = ssub.s32 16, 16
          %180 = vsyncadd [#allocation16], %s179
          %s182 = sshll.u32 %s1, 4
          %s183 = int_to_ptr.vmem [resolvable:$true] %s182
          %185 = dma.vmem_to_smem %s183, 16, [#allocation17], [#allocation16]
        $region16: #{tpu_custom_call.1} parent=11 // pred_fallthru
          _
        // Predicated region
        $region17: #{tpu_custom_call.1} parent=11 // pred_check
          %p186 = pneg %p107
        $region18: #{tpu_custom_call.1} parent=11 // pred_check_branch
          %188 = sbr.rel (%p186) target = $region20
        $region19: #{tpu_custom_call.1} parent=11 // pred_region
          %s190 = ssub.s32 16, 16
          %191 = vsyncadd [#allocation19], %s190
          %s193 = sshll.u32 %s2, 4
          %s194 = int_to_ptr.vmem [resolvable:$true] %s193
          %196 = dma.vmem_to_smem %s194, 16, [#allocation18], [#allocation19]
        $region20: #{tpu_custom_call.1} parent=11 // pred_fallthru
          _
        // Predicated region
        $region21: #{tpu_custom_call.1} parent=11 // pred_check
          %p197 = pneg %p128
        $region22: #{tpu_custom_call.1} parent=11 // pred_check_branch
          %199 = sbr.rel (%p197) target = $region24
        $region23: #{tpu_custom_call.1} parent=11 // pred_region
          %s201 = ssub.s32 16, 16
          %202 = vsyncadd [#allocation19], %s201
          %s204 = sshll.u32 %s3, 4
          %s205 = int_to_ptr.vmem [resolvable:$true] %s204
          %207 = dma.vmem_to_smem %s205, 16, [#allocation20], [#allocation19]
        $region24: #{tpu_custom_call.1} parent=11 // pred_fallthru
          _
      $region12: #{tpu_custom_call.1} parent=5 // pred_fallthru
        _
      %p208 = scmp.lt.s32.totalorder %s18, 4
      // Predicated region
      $region25: #{tpu_custom_call.1} parent=5 // pred_check
        %p209 = pneg %p208
      $region26: #{tpu_custom_call.1} parent=5 // pred_check_branch
        %211 = sbr.rel (%p209) target = $region28
      $region27: #{tpu_custom_call.1} parent=5 // pred_region
        // Predicated region
        $region29: #{tpu_custom_call.1} parent=27 // pred_check
          %p212 = pneg %p59
        $region30: #{tpu_custom_call.1} parent=27 // pred_check_branch
          %214 = sbr.rel (%p212) target = $region32
        $region31: #{tpu_custom_call.1} parent=27 // pred_region
          %s215 = sand.u32 %s49, 1
          %s216 = scalar_lea.sflag [#allocation14], %s215
          %s217 = sand.u32 %s49, 1
          %s218 = smul.addr %s217, 64
          %s219 = scalar_lea.vmem [#allocation13], %s218
          %s220 = smul.u32 4, %s27
          %s222 = ssub.s32 1024, 1024
          %223 = vsyncadd %s216, %s222
          %s224 = smul.addr %s220, 2
          %s225 = smul.addr %s26, 8
          %s226 = sadd.s32 %s224, %s225
          %s227 = smul.addr %s226, 128
          %s228 = scalar_lea.hbm %s0, %s227
          %s229 = sshll.u32 %s219, 4
          %s230 = int_to_ptr.vmem [resolvable:$true] %s229
          %235 = dma.hbm_to_vmem [thread:$0]  %s228, 1024, %s230, %s216, 128, 128, 8
        $region32: #{tpu_custom_call.1} parent=27 // pred_fallthru
          _
      $region28: #{tpu_custom_call.1} parent=5 // pred_fallthru
        _
      %p236 = scmp.le.s32.totalorder 1, %s18
      %p237 = scmp.lt.s32.totalorder %s18, 5
      %p238 = pnand %p236, %p237
      %p239 = pneg %p238
      // Predicated region
      $region33: #{tpu_custom_call.1} parent=5 // pred_check
        _
      $region34: #{tpu_custom_call.1} parent=5 // pred_check_branch
        %241 = sbr.rel (%p238) target = $region36
      $region35: #{tpu_custom_call.1} parent=5 // pred_region
        %s242 = ssub.s32 %s18, 1
        %s243 = sand.u32 %s52, 1
        %s244 = scalar_lea.sflag [#allocation14], %s243
        %s245 = sand.u32 %s52, 1
        %s246 = smul.addr %s245, 64
        %s247 = scalar_lea.vmem [#allocation13], %s246
        // Predicated region
        $region37: #{tpu_custom_call.1} parent=35 // pred_check
          %p248 = pneg %p65
        $region38: #{tpu_custom_call.1} parent=35 // pred_check_branch
          %250 = sbr.rel (%p248) target = $region40
        $region39: #{tpu_custom_call.1} parent=35 // pred_region
          %251 = dma.done %s244, 1024
        $region40: #{tpu_custom_call.1} parent=35 // pred_fallthru
          _
        // Predicated region
        $region41: #{tpu_custom_call.1} parent=35 // pred_check
          %p252 = pneg %p86
        $region42: #{tpu_custom_call.1} parent=35 // pred_check_branch
          %254 = sbr.rel (%p252) target = $region44
        $region43: #{tpu_custom_call.1} parent=35 // pred_region
          %255 = dma.done [#allocation16], 16
        $region44: #{tpu_custom_call.1} parent=35 // pred_fallthru
          _
        // Predicated region
        $region45: #{tpu_custom_call.1} parent=35 // pred_check
          %p256 = pneg %p107
        $region46: #{tpu_custom_call.1} parent=35 // pred_check_branch
          %258 = sbr.rel (%p256) target = $region48
        $region47: #{tpu_custom_call.1} parent=35 // pred_region
          %259 = dma.done [#allocation19], 16
        $region48: #{tpu_custom_call.1} parent=35 // pred_fallthru
          _
        // Predicated region
        $region49: #{tpu_custom_call.1} parent=35 // pred_check
          %p260 = pneg %p128
        $region50: #{tpu_custom_call.1} parent=35 // pred_check_branch
          %262 = sbr.rel (%p260) target = $region52
        $region51: #{tpu_custom_call.1} parent=35 // pred_region
          %263 = dma.done [#allocation19], 16
        $region52: #{tpu_custom_call.1} parent=35 // pred_fallthru
          _
        %264 = sfence
        %s265 = sand.u32 %s52, 1
        %s266 = scalar_lea.sflag [#allocation14], %s265
        %s267 = sand.u32 %s52, 1
        %s268 = smul.addr %s267, 64
        %s269 = scalar_lea.vmem [#allocation13], %s268
        %p270 = pneg %p65
        %p271 = pneg %p62
        %p272 = pneg %p86
        %p273 = pneg %p83
        %p274 = pneg %p107
        %p275 = pneg %p104
        %p276 = pneg %p128
        %p277 = pneg %p125
        %p278 = pneg %p160
        %p279 = pneg %p157
        %s280 = sand.u32 %s147, 1
        %s281 = scalar_lea.sflag [#allocation15], %s280
        %s282 = sand.u32 %s147, 1
        %s283 = smul.addr %s282, 64
        %s284 = scalar_lea.vmem [#allocation21], %s283
        %s285 = smul.u32 4, %s30
        %s286 = smul.u32 %s28, %s29
        %s287 = smul.u32 %s28, %s30
        %s288 = smul.u32 4, %s287
        %p289 = scmp.eq.s32.totalorder %s28, 0
        %p290 = scmp.eq.s32.totalorder %s29, 0
        %p291 = scmp.eq.s32.totalorder %s30, 0
        %p292 = pnand %p290, %p291
        %p293 = pneg %p292
        %p294 = pnand %p289, %p293
        %p295 = pneg %p294
        // Predicated region
        $region53: #{tpu_custom_call.1} parent=35 // pred_check
          _
        $region54: #{tpu_custom_call.1} parent=35 // pred_check_branch
          %297 = sbr.rel (%p294) target = $region56
        $region55: #{tpu_custom_call.1} parent=35 // pred_region
          %vm298 = vcmask 122880
          %299 = vst.msk [vmem:[#allocation7] sm:$0x1] %vm298, 0.0
          %300 = vst.msk [vmem:[#allocation8] sm:$0x1] %vm298, 0.0
          %vm301 = vcmask 179200
          %302 = vst.msk [vmem:[#allocation6] sm:$0xff] %vm301, 0.0
          %303 = vst.msk [vmem:[#allocation6 + $0x8] sm:$0xff] %vm301, 0.0
          %vm304 = vcmask 177152
          %305 = vst.msk [vmem:[#allocation6 + $0x10] sm:$0x3f] %vm304, 0.0
        $region56: #{tpu_custom_call.1} parent=35 // pred_fallthru
          _
        // Predicated region
        $region57: #{tpu_custom_call.1} parent=35 // pred_check
          %p306 = pneg %p289
        $region58: #{tpu_custom_call.1} parent=35 // pred_check_branch
          %308 = sbr.rel (%p306) target = $region60
        $region59: #{tpu_custom_call.1} parent=35 // pred_region
          %v309 = vld [vmem:[%s247] sm:$0xff]
          %v310 = vld [vmem:[%s247 + $0x8] sm:$0xff]
          %v311 = vld [vmem:[%s247 + $0x10] sm:$0xff]
          %v312 = vld [vmem:[%s247 + $0x18] sm:$0xff]
          %v313 = vld [vmem:[%s247 + $0x20] sm:$0xff]
          %v314 = vld [vmem:[%s247 + $0x28] sm:$0xff]
          %v315 = vld [vmem:[%s247 + $0x30] sm:$0xff]
          %v316 = vld [vmem:[%s247 + $0x38] sm:$0xff]
          // Predicated region
          $region61: #{tpu_custom_call.1} parent=59 // pred_check
            %p317 = pneg %p291
          $region62: #{tpu_custom_call.1} parent=59 // pred_check_branch
            %319 = sbr.rel (%p317) target = $region64
          $region63: #{tpu_custom_call.1} parent=59 // pred_region
            %vm320 = vcmask 130048
            %321 = vst.msk [vmem:[#allocation5] sm:$0xff] %vm320, %v309
            %322 = vst.msk [vmem:[#allocation5 + $0x8] sm:$0xff] %vm320, %v310
            %323 = vst.msk [vmem:[#allocation3] sm:$0xff] %vm320, 0.0
            %324 = vst.msk [vmem:[#allocation3 + $0x8] sm:$0xff] %vm320, 0.0
            %325 = vst.msk [vmem:[#allocation4] sm:$0xff] %vm320, 0.0
            %326 = vst.msk [vmem:[#allocation4 + $0x8] sm:$0xff] %vm320, 0.0
          $region64: #{tpu_custom_call.1} parent=59 // pred_fallthru
            _
          %v327 = vld [vmem:[#allocation5] sm:$0xff]
          %v328 = vld [vmem:[#allocation5 + $0x8] sm:$0xff]
          %v329 = vsub.f32 %v309, %v327
          %v330 = vsub.f32 %v310, %v328
          %v331 = vsub.f32 %v311, %v327
          %v332 = vsub.f32 %v312, %v328
          %v333 = vsub.f32 %v313, %v327
          %v334 = vsub.f32 %v314, %v328
          %v335 = vsub.f32 %v315, %v327
          %v336 = vsub.f32 %v316, %v328
          %v337 = vld [vmem:[#allocation3] sm:$0xff]
          %v338 = vld [vmem:[#allocation3 + $0x8] sm:$0xff]
          %vm339 = vcmask 130048
          %v340 = vsel %vm339, %v329, 0.0
          %v341 = vsel %vm339, %v331, 0.0
          %v342 = vadd.f32 %v340, %v341
          %v343 = vsel %vm339, %v333, 0.0
          %v344 = vadd.f32 %v342, %v343
          %v345 = vsel %vm339, %v335, 0.0
          %v346 = vadd.f32 %v344, %v345
          %v347 = vsel %vm339, %v330, 0.0
          %v348 = vsel %vm339, %v332, 0.0
          %v349 = vadd.f32 %v347, %v348
          %v350 = vsel %vm339, %v334, 0.0
          %v351 = vadd.f32 %v349, %v350
          %v352 = vsel %vm339, %v336, 0.0
          %v353 = vadd.f32 %v351, %v352
          %v354 = vadd.f32 %v337, %v346
          %v355 = vadd.f32 %v338, %v353
          %356 = vst.msk [vmem:[#allocation3] sm:$0xff] %vm339, %v354
          %357 = vst.msk [vmem:[#allocation3 + $0x8] sm:$0xff] %vm339, %v355
          %v358 = vld [vmem:[#allocation4] sm:$0xff]
          %v359 = vld [vmem:[#allocation4 + $0x8] sm:$0xff]
          %v360 = vmul.f32 %v329, %v329
          %v361 = vmul.f32 %v330, %v330
          %v362 = vmul.f32 %v331, %v331
          %v363 = vmul.f32 %v332, %v332
          %v364 = vmul.f32 %v333, %v333
          %v365 = vmul.f32 %v334, %v334
          %v366 = vmul.f32 %v335, %v335
          %v367 = vmul.f32 %v336, %v336
          %v368 = vsel %vm339, %v360, 0.0
          %v369 = vsel %vm339, %v362, 0.0
          %v370 = vadd.f32 %v368, %v369
          %v371 = vsel %vm339, %v364, 0.0
          %v372 = vadd.f32 %v370, %v371
          %v373 = vsel %vm339, %v366, 0.0
          %v374 = vadd.f32 %v372, %v373
          %v375 = vsel %vm339, %v361, 0.0
          %v376 = vsel %vm339, %v363, 0.0
          %v377 = vadd.f32 %v375, %v376
          %v378 = vsel %vm339, %v365, 0.0
          %v379 = vadd.f32 %v377, %v378
          %v380 = vsel %vm339, %v367, 0.0
          %v381 = vadd.f32 %v379, %v380
          %v382 = vadd.f32 %v358, %v374
          %v383 = vadd.f32 %v359, %v381
          %384 = vst.msk [vmem:[#allocation4] sm:$0xff] %vm339, %v382
          %385 = vst.msk [vmem:[#allocation4 + $0x8] sm:$0xff] %vm339, %v383
        $region60: #{tpu_custom_call.1} parent=35 // pred_fallthru
          _
        %p386 = pnand %p289, %p291
        %p387 = pneg %p386
        // Predicated region
        $region65: #{tpu_custom_call.1} parent=35 // pred_check
          _
        $region66: #{tpu_custom_call.1} parent=35 // pred_check_branch
          %389 = sbr.rel (%p386) target = $region68
        $region67: #{tpu_custom_call.1} parent=35 // pred_region
          %v390 = vld [vmem:[#allocation3] sm:$0xff]
          %v391 = vld [vmem:[#allocation3 + $0x8] sm:$0xff]
          %v392 = vld [vmem:[#allocation4] sm:$0xff]
          %v393 = vld [vmem:[#allocation4 + $0x8] sm:$0xff]
          %v394 = vld [vmem:[#allocation5] sm:$0xff]
          %v395 = vld [vmem:[#allocation5 + $0x8] sm:$0xff]
          %v396 = vmul.f32 %v390, 0.25
          %v397 = vmul.f32 %v391, 0.25
          %v398 = vadd.f32 %v394, %v396
          %v399 = vadd.f32 %v395, %v397
          %v400 = vmul.f32 %v390, %v390
          %v401 = vmul.f32 %v391, %v391
          %v402 = vmul.f32 %v400, 0.25
          %v403 = vmul.f32 %v401, 0.25
          %v404 = vsub.f32 %v392, %v402
          %v405 = vsub.f32 %v393, %v403
          %v406 = vmul.f32 %v404, 0.33333334
          %v407 = vmul.f32 %v405, 0.33333334
          %v408 = vmax.f32 %v406, 0.0
          %v409 = vmax.f32 %v407, 0.0
          %v410 = vrsqrt.pop %v408
          %v411 = vmul.f32 %v408, %v410
          %vm412 = vcmp.eq.f32.partialorder %v408, inf
          %v413 = vsel %vm412, %v408, %v411
          %vm414 = vcmp.eq.f32.partialorder %v408, 0.0
          %v415 = vand.u32 %v408, 2147483648
          %v416 = vsel %vm414, %v415, %v413
          %v417 = vrsqrt.pop %v409
          %v418 = vmul.f32 %v409, %v417
          %vm419 = vcmp.eq.f32.partialorder %v409, inf
          %v420 = vsel %vm419, %v409, %v418
          %vm421 = vcmp.eq.f32.partialorder %v409, 0.0
          %v422 = vand.u32 %v409, 2147483648
          %v423 = vsel %vm421, %v422, %v420
          %s424 = sld [smem:[#allocation18]]
          %s425 = sld [smem:[#allocation18 + $0x1]]
          %s426 = sadd.f32 %s424, 0.5
          %v427 = vstv %s426
          %v428 = vmul.f32 %v427, %v416
          %v429 = vmul.f32 %v427, %v423
          %s430 = sadd.f32 %s425, 0.5
          %v431 = vstv %s430
          %v432 = vmul.f32 %v431, %v398
          %v433 = vmul.f32 %v431, %v399
          %v434 = vadd.f32 %v428, %v432
          %v435 = vadd.f32 %v429, %v433
          %438 = vrot.lane.b32.xlu0 %v434, 3
          %v439 = vpop.permute.xlu0 %438
          %440 = vrot.lane.b32.xlu0 %v435, 3
          %v441 = vpop.permute.xlu0 %440
          %vm444 = vcmask 154648
          %445 = vst.msk [vmem:[#allocation6 + $0x3] sm:$0xff] %vm444, %v439
          %446 = vst.msk [vmem:[#allocation6 + $0xb] sm:$0xff] %vm444, %v441
          %v447 = vld [vmem:[#allocation6] sm:$0xff]
          %v448 = vld [vmem:[#allocation6 + $0x8] sm:$0xff]
          %v449 = vld [vmem:[#allocation6 + $0x10] sm:$0x3f]
          %s450 = sld [smem:[#allocation17]]
          %v451 = vstv %s450
          %v452 = vmul.f32 %v451, %v447
          %v453 = vmul.f32 %v451, %v448
          %v454 = vadd.f32 %v452, 0.0
          %v455 = vadd.f32 %v453, 0.0
          %s456 = sld [smem:[#allocation17 + $0x1]]
          %v457 = vstv %s456
          %v458 = vmul.f32 %v457, %v447
          %v459 = vmul.f32 %v457, %v448
          %v460 = vadd.f32 %v458, 0.0
          %v461 = vadd.f32 %v459, 0.0
          %s462 = sld [smem:[#allocation17 + $0x2]]
          %v463 = vstv %s462
          %v464 = vmul.f32 %v463, %v447
          %v465 = vmul.f32 %v463, %v448
          %v466 = vadd.f32 %v464, 0.0
          %v467 = vadd.f32 %v465, 0.0
          %s468 = sld [smem:[#allocation17 + $0x3]]
          %v469 = vstv %s468
          %v470 = vmul.f32 %v469, %v447
          %v471 = vmul.f32 %v469, %v448
          %v472 = vadd.f32 %v470, 0.0
          %v473 = vadd.f32 %v471, 0.0
          %s474 = sld [smem:[#allocation17 + $0x4]]
          %v475 = vstv %s474
          %v476 = vmul.f32 %v475, %v447
          %v477 = vmul.f32 %v475, %v448
          %480 = vrot.lane.b32.xlu0 %v476, 124
          %v481 = vpop.permute.xlu0 %480
          %482 = vrot.lane.b32.xlu0 %v477, 124
          %v483 = vpop.permute.xlu0 %482
          %v486 = vadd.f32 %v454, %v481
          %v487 = vadd.f32 %v455, %v483
          %s488 = sld [smem:[#allocation17 + $0x5]]
          %v489 = vstv %s488
          %v490 = vmul.f32 %v489, %v447
          %v491 = vmul.f32 %v489, %v448
          %494 = vrot.lane.b32.xlu0 %v490, 124
          %v495 = vpop.permute.xlu0 %494
          %496 = vrot.lane.b32.xlu0 %v491, 124
          %v497 = vpop.permute.xlu0 %496
          %v500 = vadd.f32 %v460, %v495
          %v501 = vadd.f32 %v461, %v497
          %s502 = sld [smem:[#allocation17 + $0x6]]
          %v503 = vstv %s502
          %v504 = vmul.f32 %v503, %v447
          %v505 = vmul.f32 %v503, %v448
          %508 = vrot.lane.b32.xlu0 %v504, 124
          %v509 = vpop.permute.xlu0 %508
          %510 = vrot.lane.b32.xlu0 %v505, 124
          %v511 = vpop.permute.xlu0 %510
          %v514 = vadd.f32 %v466, %v509
          %v515 = vadd.f32 %v467, %v511
          %s516 = sld [smem:[#allocation17 + $0x7]]
          %v517 = vstv %s516
          %v518 = vmul.f32 %v517, %v447
          %v519 = vmul.f32 %v517, %v448
          %v520 = vmul.f32 %v517, %v449
          %vm524 = vcmask 1046528
          %v525 = vrot.slane %v518, 1
          %v526 = vrot.slane %v519, 1
          %v527 = vsel %vm524, %v525, %v526
          %v528 = vrot.slane %v520, 1
          %v529 = vsel %vm524, %v526, %v528
          %530 = vrot.lane.b32.xlu0 %v527, 3
          %v531 = vpop.permute.xlu0 %530
          %532 = vrot.lane.b32.xlu0 %v529, 3
          %v533 = vpop.permute.xlu0 %532
          %v536 = vadd.f32 %v472, %v531
          %v537 = vadd.f32 %v473, %v533
          %s538 = sld [smem:[#allocation17 + $0x8]]
          %v539 = vstv %s538
          %v540 = vmul.f32 %v539, %v447
          %v541 = vmul.f32 %v539, %v448
          %v542 = vmul.f32 %v539, %v449
          %v546 = vrot.slane %v540, 1
          %v547 = vrot.slane %v541, 1
          %v548 = vsel %vm524, %v546, %v547
          %v549 = vrot.slane %v542, 1
          %v550 = vsel %vm524, %v547, %v549
          %551 = vrot.lane.b32.xlu0 %v548, 127
          %v552 = vpop.permute.xlu0 %551
          %553 = vrot.lane.b32.xlu0 %v550, 127
          %v554 = vpop.permute.xlu0 %553
          %v557 = vadd.f32 %v486, %v552
          %v558 = vadd.f32 %v487, %v554
          %s559 = sld [smem:[#allocation17 + $0x9]]
          %v560 = vstv %s559
          %v561 = vmul.f32 %v560, %v447
          %v562 = vmul.f32 %v560, %v448
          %v563 = vmul.f32 %v560, %v449
          %v567 = vrot.slane %v561, 1
          %v568 = vrot.slane %v562, 1
          %v569 = vsel %vm524, %v567, %v568
          %v570 = vrot.slane %v563, 1
          %v571 = vsel %vm524, %v568, %v570
          %572 = vrot.lane.b32.xlu0 %v569, 127
          %v573 = vpop.permute.xlu0 %572
          %574 = vrot.lane.b32.xlu0 %v571, 127
          %v575 = vpop.permute.xlu0 %574
          %v578 = vadd.f32 %v500, %v573
          %v579 = vadd.f32 %v501, %v575
          %s580 = sld [smem:[#allocation17 + $0xa]]
          %v581 = vstv %s580
          %v582 = vmul.f32 %v581, %v447
          %v583 = vmul.f32 %v581, %v448
          %v584 = vmul.f32 %v581, %v449
          %v588 = vrot.slane %v582, 1
          %v589 = vrot.slane %v583, 1
          %v590 = vsel %vm524, %v588, %v589
          %v591 = vrot.slane %v584, 1
          %v592 = vsel %vm524, %v589, %v591
          %593 = vrot.lane.b32.xlu0 %v590, 127
          %v594 = vpop.permute.xlu0 %593
          %595 = vrot.lane.b32.xlu0 %v592, 127
          %v596 = vpop.permute.xlu0 %595
          %v599 = vadd.f32 %v514, %v594
          %v600 = vadd.f32 %v515, %v596
          %s601 = sld [smem:[#allocation17 + $0xb]]
          %v602 = vstv %s601
          %v603 = vmul.f32 %v602, %v447
          %v604 = vmul.f32 %v602, %v448
          %v605 = vmul.f32 %v602, %v449
          %v609 = vrot.slane %v603, 1
          %v610 = vrot.slane %v604, 1
          %v611 = vsel %vm524, %v609, %v610
          %v612 = vrot.slane %v605, 1
          %v613 = vsel %vm524, %v610, %v612
          %614 = vrot.lane.b32.xlu0 %v611, 127
          %v615 = vpop.permute.xlu0 %614
          %616 = vrot.lane.b32.xlu0 %v613, 127
          %v617 = vpop.permute.xlu0 %616
          %v620 = vadd.f32 %v536, %v615
          %v621 = vadd.f32 %v537, %v617
          %s622 = sld [smem:[#allocation17 + $0xc]]
          %v623 = vstv %s622
          %v624 = vmul.f32 %v623, %v447
          %v625 = vmul.f32 %v623, %v448
          %v626 = vmul.f32 %v623, %v449
          %v630 = vrot.slane %v624, 1
          %v631 = vrot.slane %v625, 1
          %v632 = vsel %vm524, %v630, %v631
          %v633 = vrot.slane %v626, 1
          %v634 = vsel %vm524, %v631, %v633
          %635 = vrot.lane.b32.xlu0 %v632, 123
          %v636 = vpop.permute.xlu0 %635
          %637 = vrot.lane.b32.xlu0 %v634, 123
          %v638 = vpop.permute.xlu0 %637
          %v641 = vadd.f32 %v557, %v636
          %v642 = vadd.f32 %v558, %v638
          %s643 = sld [smem:[#allocation17 + $0xd]]
          %v644 = vstv %s643
          %v645 = vmul.f32 %v644, %v447
          %v646 = vmul.f32 %v644, %v448
          %v647 = vmul.f32 %v644, %v449
          %v651 = vrot.slane %v645, 1
          %v652 = vrot.slane %v646, 1
          %v653 = vsel %vm524, %v651, %v652
          %v654 = vrot.slane %v647, 1
          %v655 = vsel %vm524, %v652, %v654
          %656 = vrot.lane.b32.xlu0 %v653, 123
          %v657 = vpop.permute.xlu0 %656
          %658 = vrot.lane.b32.xlu0 %v655, 123
          %v659 = vpop.permute.xlu0 %658
          %v662 = vadd.f32 %v578, %v657
          %v663 = vadd.f32 %v579, %v659
          %s664 = sld [smem:[#allocation17 + $0xe]]
          %v665 = vstv %s664
          %v666 = vmul.f32 %v665, %v447
          %v667 = vmul.f32 %v665, %v448
          %v668 = vmul.f32 %v665, %v449
          %vm672 = vcmask 1045504
          %v673 = vrot.slane %v666, 2
          %v674 = vrot.slane %v667, 2
          %v675 = vsel %vm672, %v673, %v674
          %v676 = vrot.slane %v668, 2
          %v677 = vsel %vm672, %v674, %v676
          %678 = vrot.lane.b32.xlu0 %v675, 2
          %v679 = vpop.permute.xlu0 %678
          %680 = vrot.lane.b32.xlu0 %v677, 2
          %v681 = vpop.permute.xlu0 %680
          %v684 = vadd.f32 %v599, %v679
          %v685 = vadd.f32 %v600, %v681
          %s686 = sld [smem:[#allocation17 + $0xf]]
          %v687 = vstv %s686
          %v688 = vmul.f32 %v687, %v447
          %v689 = vmul.f32 %v687, %v448
          %v690 = vmul.f32 %v687, %v449
          %v694 = vrot.slane %v688, 2
          %v695 = vrot.slane %v689, 2
          %v696 = vsel %vm672, %v694, %v695
          %v697 = vrot.slane %v690, 2
          %v698 = vsel %vm672, %v695, %v697
          %699 = vrot.lane.b32.xlu0 %v696, 2
          %v700 = vpop.permute.xlu0 %699
          %701 = vrot.lane.b32.xlu0 %v698, 2
          %v702 = vpop.permute.xlu0 %701
          %v705 = vadd.f32 %v620, %v700
          %v706 = vadd.f32 %v621, %v702
          %s707 = sld [smem:[#allocation17 + $0x10]]
          %v708 = vstv %s707
          %v709 = vmul.f32 %v708, %v447
          %v710 = vmul.f32 %v708, %v448
          %v711 = vmul.f32 %v708, %v449
          %v715 = vrot.slane %v709, 2
          %v716 = vrot.slane %v710, 2
          %v717 = vsel %vm672, %v715, %v716
          %v718 = vrot.slane %v711, 2
          %v719 = vsel %vm672, %v716, %v718
          %720 = vrot.lane.b32.xlu0 %v717, 126
          %v721 = vpop.permute.xlu0 %720
          %722 = vrot.lane.b32.xlu0 %v719, 126
          %v723 = vpop.permute.xlu0 %722
          %v726 = vadd.f32 %v641, %v721
          %v727 = vadd.f32 %v642, %v723
          %s728 = sld [smem:[#allocation17 + $0x11]]
          %v729 = vstv %s728
          %v730 = vmul.f32 %v729, %v447
          %v731 = vmul.f32 %v729, %v448
          %v732 = vmul.f32 %v729, %v449
          %v736 = vrot.slane %v730, 2
          %v737 = vrot.slane %v731, 2
          %v738 = vsel %vm672, %v736, %v737
          %v739 = vrot.slane %v732, 2
          %v740 = vsel %vm672, %v737, %v739
          %741 = vrot.lane.b32.xlu0 %v738, 126
          %v742 = vpop.permute.xlu0 %741
          %743 = vrot.lane.b32.xlu0 %v740, 126
          %v744 = vpop.permute.xlu0 %743
          %v747 = vadd.f32 %v662, %v742
          %v748 = vadd.f32 %v663, %v744
          %s749 = sld [smem:[#allocation17 + $0x12]]
          %v750 = vstv %s749
          %v751 = vmul.f32 %v750, %v447
          %v752 = vmul.f32 %v750, %v448
          %v753 = vmul.f32 %v750, %v449
          %v757 = vrot.slane %v751, 2
          %v758 = vrot.slane %v752, 2
          %v759 = vsel %vm672, %v757, %v758
          %v760 = vrot.slane %v753, 2
          %v761 = vsel %vm672, %v758, %v760
          %762 = vrot.lane.b32.xlu0 %v759, 126
          %v763 = vpop.permute.xlu0 %762
          %764 = vrot.lane.b32.xlu0 %v761, 126
          %v765 = vpop.permute.xlu0 %764
          %v768 = vadd.f32 %v684, %v763
          %v769 = vadd.f32 %v685, %v765
          %s770 = sld [smem:[#allocation17 + $0x13]]
          %v771 = vstv %s770
          %v772 = vmul.f32 %v771, %v447
          %v773 = vmul.f32 %v771, %v448
          %v774 = vmul.f32 %v771, %v449
          %v778 = vrot.slane %v772, 2
          %v779 = vrot.slane %v773, 2
          %v780 = vsel %vm672, %v778, %v779
          %v781 = vrot.slane %v774, 2
          %v782 = vsel %vm672, %v779, %v781
          %783 = vrot.lane.b32.xlu0 %v780, 126
          %v784 = vpop.permute.xlu0 %783
          %785 = vrot.lane.b32.xlu0 %v782, 126
          %v786 = vpop.permute.xlu0 %785
          %v789 = vadd.f32 %v705, %v784
          %v790 = vadd.f32 %v706, %v786
          %s791 = sld [smem:[#allocation17 + $0x14]]
          %v792 = vstv %s791
          %v793 = vmul.f32 %v792, %v447
          %v794 = vmul.f32 %v792, %v448
          %v795 = vmul.f32 %v792, %v449
          %v799 = vrot.slane %v793, 2
          %v800 = vrot.slane %v794, 2
          %v801 = vsel %vm672, %v799, %v800
          %v802 = vrot.slane %v795, 2
          %v803 = vsel %vm672, %v800, %v802
          %804 = vrot.lane.b32.xlu0 %v801, 122
          %v805 = vpop.permute.xlu0 %804
          %806 = vrot.lane.b32.xlu0 %v803, 122
          %v807 = vpop.permute.xlu0 %806
          %v810 = vadd.f32 %v726, %v805
          %v811 = vadd.f32 %v727, %v807
          %s812 = sld [smem:[#allocation17 + $0x15]]
          %v813 = vstv %s812
          %v814 = vmul.f32 %v813, %v447
          %v815 = vmul.f32 %v813, %v448
          %v816 = vmul.f32 %v813, %v449
          %vm820 = vcmask 1044480
          %v821 = vrot.slane %v814, 3
          %v822 = vrot.slane %v815, 3
          %v823 = vsel %vm820, %v821, %v822
          %v824 = vrot.slane %v816, 3
          %v825 = vsel %vm820, %v822, %v824
          %826 = vrot.lane.b32.xlu0 %v823, 1
          %v827 = vpop.permute.xlu0 %826
          %828 = vrot.lane.b32.xlu0 %v825, 1
          %v829 = vpop.permute.xlu0 %828
          %v832 = vadd.f32 %v747, %v827
          %v833 = vadd.f32 %v748, %v829
          %s834 = sld [smem:[#allocation17 + $0x16]]
          %v835 = vstv %s834
          %v836 = vmul.f32 %v835, %v447
          %v837 = vmul.f32 %v835, %v448
          %v838 = vmul.f32 %v835, %v449
          %v842 = vrot.slane %v836, 3
          %v843 = vrot.slane %v837, 3
          %v844 = vsel %vm820, %v842, %v843
          %v845 = vrot.slane %v838, 3
          %v846 = vsel %vm820, %v843, %v845
          %847 = vrot.lane.b32.xlu0 %v844, 1
          %v848 = vpop.permute.xlu0 %847
          %849 = vrot.lane.b32.xlu0 %v846, 1
          %v850 = vpop.permute.xlu0 %849
          %v853 = vadd.f32 %v768, %v848
          %v854 = vadd.f32 %v769, %v850
          %s855 = sld [smem:[#allocation17 + $0x17]]
          %v856 = vstv %s855
          %v857 = vmul.f32 %v856, %v447
          %v858 = vmul.f32 %v856, %v448
          %v859 = vmul.f32 %v856, %v449
          %v863 = vrot.slane %v857, 3
          %v864 = vrot.slane %v858, 3
          %v865 = vsel %vm820, %v863, %v864
          %v866 = vrot.slane %v859, 3
          %v867 = vsel %vm820, %v864, %v866
          %868 = vrot.lane.b32.xlu0 %v865, 1
          %v869 = vpop.permute.xlu0 %868
          %870 = vrot.lane.b32.xlu0 %v867, 1
          %v871 = vpop.permute.xlu0 %870
          %v874 = vadd.f32 %v789, %v869
          %v875 = vadd.f32 %v790, %v871
          %s876 = sld [smem:[#allocation17 + $0x18]]
          %v877 = vstv %s876
          %v878 = vmul.f32 %v877, %v447
          %v879 = vmul.f32 %v877, %v448
          %v880 = vmul.f32 %v877, %v449
          %v884 = vrot.slane %v878, 3
          %v885 = vrot.slane %v879, 3
          %v886 = vsel %vm820, %v884, %v885
          %v887 = vrot.slane %v880, 3
          %v888 = vsel %vm820, %v885, %v887
          %889 = vrot.lane.b32.xlu0 %v886, 125
          %v890 = vpop.permute.xlu0 %889
          %891 = vrot.lane.b32.xlu0 %v888, 125
          %v892 = vpop.permute.xlu0 %891
          %v895 = vadd.f32 %v810, %v890
          %v896 = vadd.f32 %v811, %v892
          %s897 = sld [smem:[#allocation17 + $0x19]]
          %v898 = vstv %s897
          %v899 = vmul.f32 %v898, %v447
          %v900 = vmul.f32 %v898, %v448
          %v901 = vmul.f32 %v898, %v449
          %v905 = vrot.slane %v899, 3
          %v906 = vrot.slane %v900, 3
          %v907 = vsel %vm820, %v905, %v906
          %v908 = vrot.slane %v901, 3
          %v909 = vsel %vm820, %v906, %v908
          %910 = vrot.lane.b32.xlu0 %v907, 125
          %v911 = vpop.permute.xlu0 %910
          %912 = vrot.lane.b32.xlu0 %v909, 125
          %v913 = vpop.permute.xlu0 %912
          %v916 = vadd.f32 %v832, %v911
          %v917 = vadd.f32 %v833, %v913
          %s918 = sld [smem:[#allocation17 + $0x1a]]
          %v919 = vstv %s918
          %v920 = vmul.f32 %v919, %v447
          %v921 = vmul.f32 %v919, %v448
          %v922 = vmul.f32 %v919, %v449
          %v926 = vrot.slane %v920, 3
          %v927 = vrot.slane %v921, 3
          %v928 = vsel %vm820, %v926, %v927
          %v929 = vrot.slane %v922, 3
          %v930 = vsel %vm820, %v927, %v929
          %931 = vrot.lane.b32.xlu0 %v928, 125
          %v932 = vpop.permute.xlu0 %931
          %933 = vrot.lane.b32.xlu0 %v930, 125
          %v934 = vpop.permute.xlu0 %933
          %v937 = vadd.f32 %v853, %v932
          %v938 = vadd.f32 %v854, %v934
          %s939 = sld [smem:[#allocation17 + $0x1b]]
          %v940 = vstv %s939
          %v941 = vmul.f32 %v940, %v447
          %v942 = vmul.f32 %v940, %v448
          %v943 = vmul.f32 %v940, %v449
          %v947 = vrot.slane %v941, 3
          %v948 = vrot.slane %v942, 3
          %v949 = vsel %vm820, %v947, %v948
          %v950 = vrot.slane %v943, 3
          %v951 = vsel %vm820, %v948, %v950
          %952 = vrot.lane.b32.xlu0 %v949, 125
          %v953 = vpop.permute.xlu0 %952
          %954 = vrot.lane.b32.xlu0 %v951, 125
          %v955 = vpop.permute.xlu0 %954
          %v958 = vadd.f32 %v874, %v953
          %v959 = vadd.f32 %v875, %v955
          %s960 = sld [smem:[#allocation17 + $0x1c]]
          %v961 = vstv %s960
          %v962 = vmul.f32 %v961, %v447
          %v963 = vmul.f32 %v961, %v448
          %v964 = vmul.f32 %v961, %v449
          %vm968 = vcmask 1043456
          %v969 = vrot.slane %v962, 4
          %v970 = vrot.slane %v963, 4
          %v971 = vsel %vm968, %v969, %v970
          %v972 = vrot.slane %v964, 4
          %v973 = vsel %vm968, %v970, %v972
          %v976 = vadd.f32 %v895, %v971
          %v977 = vadd.f32 %v896, %v973
          %s978 = sld [smem:[#allocation17 + $0x1d]]
          %v979 = vstv %s978
          %v980 = vmul.f32 %v979, %v447
          %v981 = vmul.f32 %v979, %v448
          %v982 = vmul.f32 %v979, %v449
          %v986 = vrot.slane %v980, 4
          %v987 = vrot.slane %v981, 4
          %v988 = vsel %vm968, %v986, %v987
          %v989 = vrot.slane %v982, 4
          %v990 = vsel %vm968, %v987, %v989
          %v993 = vadd.f32 %v916, %v988
          %v994 = vadd.f32 %v917, %v990
          %s995 = sld [smem:[#allocation17 + $0x1e]]
          %v996 = vstv %s995
          %v997 = vmul.f32 %v996, %v447
          %v998 = vmul.f32 %v996, %v448
          %v999 = vmul.f32 %v996, %v449
          %v1003 = vrot.slane %v997, 4
          %v1004 = vrot.slane %v998, 4
          %v1005 = vsel %vm968, %v1003, %v1004
          %v1006 = vrot.slane %v999, 4
          %v1007 = vsel %vm968, %v1004, %v1006
          %v1010 = vadd.f32 %v937, %v1005
          %v1011 = vadd.f32 %v938, %v1007
          %s1012 = sld [smem:[#allocation17 + $0x1f]]
          %v1013 = vstv %s1012
          %v1014 = vmul.f32 %v1013, %v447
          %v1015 = vmul.f32 %v1013, %v448
          %v1016 = vmul.f32 %v1013, %v449
          %v1020 = vrot.slane %v1014, 4
          %v1021 = vrot.slane %v1015, 4
          %v1022 = vsel %vm968, %v1020, %v1021
          %v1023 = vrot.slane %v1016, 4
          %v1024 = vsel %vm968, %v1021, %v1023
          %v1027 = vadd.f32 %v958, %v1022
          %v1028 = vadd.f32 %v959, %v1024
          %s1029 = sld [smem:[#allocation17 + $0x20]]
          %v1030 = vstv %s1029
          %v1031 = vmul.f32 %v1030, %v447
          %v1032 = vmul.f32 %v1030, %v448
          %v1033 = vmul.f32 %v1030, %v449
          %v1037 = vrot.slane %v1031, 4
          %v1038 = vrot.slane %v1032, 4
          %v1039 = vsel %vm968, %v1037, %v1038
          %v1040 = vrot.slane %v1033, 4
          %v1041 = vsel %vm968, %v1038, %v1040
          %1042 = vrot.lane.b32.xlu0 %v1039, 124
          %v1043 = vpop.permute.xlu0 %1042
          %1044 = vrot.lane.b32.xlu0 %v1041, 124
          %v1045 = vpop.permute.xlu0 %1044
          %v1048 = vadd.f32 %v976, %v1043
          %v1049 = vadd.f32 %v977, %v1045
          %s1050 = sld [smem:[#allocation17 + $0x21]]
          %v1051 = vstv %s1050
          %v1052 = vmul.f32 %v1051, %v447
          %v1053 = vmul.f32 %v1051, %v448
          %v1054 = vmul.f32 %v1051, %v449
          %v1058 = vrot.slane %v1052, 4
          %v1059 = vrot.slane %v1053, 4
          %v1060 = vsel %vm968, %v1058, %v1059
          %v1061 = vrot.slane %v1054, 4
          %v1062 = vsel %vm968, %v1059, %v1061
          %1063 = vrot.lane.b32.xlu0 %v1060, 124
          %v1064 = vpop.permute.xlu0 %1063
          %1065 = vrot.lane.b32.xlu0 %v1062, 124
          %v1066 = vpop.permute.xlu0 %1065
          %v1069 = vadd.f32 %v993, %v1064
          %v1070 = vadd.f32 %v994, %v1066
          %s1071 = sld [smem:[#allocation17 + $0x22]]
          %v1072 = vstv %s1071
          %v1073 = vmul.f32 %v1072, %v447
          %v1074 = vmul.f32 %v1072, %v448
          %v1075 = vmul.f32 %v1072, %v449
          %v1079 = vrot.slane %v1073, 4
          %v1080 = vrot.slane %v1074, 4
          %v1081 = vsel %vm968, %v1079, %v1080
          %v1082 = vrot.slane %v1075, 4
          %v1083 = vsel %vm968, %v1080, %v1082
          %1084 = vrot.lane.b32.xlu0 %v1081, 124
          %v1085 = vpop.permute.xlu0 %1084
          %1086 = vrot.lane.b32.xlu0 %v1083, 124
          %v1087 = vpop.permute.xlu0 %1086
          %v1090 = vadd.f32 %v1010, %v1085
          %v1091 = vadd.f32 %v1011, %v1087
          %s1092 = sld [smem:[#allocation17 + $0x23]]
          %v1093 = vstv %s1092
          %v1094 = vmul.f32 %v1093, %v447
          %v1095 = vmul.f32 %v1093, %v448
          %v1096 = vmul.f32 %v1093, %v449
          %vm1100 = vcmask 1042432
          %v1101 = vrot.slane %v1094, 5
          %v1102 = vrot.slane %v1095, 5
          %v1103 = vsel %vm1100, %v1101, %v1102
          %v1104 = vrot.slane %v1096, 5
          %v1105 = vsel %vm1100, %v1102, %v1104
          %1106 = vrot.lane.b32.xlu0 %v1103, 3
          %v1107 = vpop.permute.xlu0 %1106
          %1108 = vrot.lane.b32.xlu0 %v1105, 3
          %v1109 = vpop.permute.xlu0 %1108
          %v1112 = vadd.f32 %v1027, %v1107
          %v1113 = vadd.f32 %v1028, %v1109
          %s1114 = sld [smem:[#allocation17 + $0x24]]
          %v1115 = vstv %s1114
          %v1116 = vmul.f32 %v1115, %v447
          %v1117 = vmul.f32 %v1115, %v448
          %v1118 = vmul.f32 %v1115, %v449
          %v1122 = vrot.slane %v1116, 5
          %v1123 = vrot.slane %v1117, 5
          %v1124 = vsel %vm1100, %v1122, %v1123
          %v1125 = vrot.slane %v1118, 5
          %v1126 = vsel %vm1100, %v1123, %v1125
          %1127 = vrot.lane.b32.xlu0 %v1124, 127
          %v1128 = vpop.permute.xlu0 %1127
          %1129 = vrot.lane.b32.xlu0 %v1126, 127
          %v1130 = vpop.permute.xlu0 %1129
          %v1133 = vadd.f32 %v1048, %v1128
          %v1134 = vadd.f32 %v1049, %v1130
          %s1135 = sld [smem:[#allocation17 + $0x25]]
          %v1136 = vstv %s1135
          %v1137 = vmul.f32 %v1136, %v447
          %v1138 = vmul.f32 %v1136, %v448
          %v1139 = vmul.f32 %v1136, %v449
          %v1143 = vrot.slane %v1137, 5
          %v1144 = vrot.slane %v1138, 5
          %v1145 = vsel %vm1100, %v1143, %v1144
          %v1146 = vrot.slane %v1139, 5
          %v1147 = vsel %vm1100, %v1144, %v1146
          %1148 = vrot.lane.b32.xlu0 %v1145, 127
          %v1149 = vpop.permute.xlu0 %1148
          %1150 = vrot.lane.b32.xlu0 %v1147, 127
          %v1151 = vpop.permute.xlu0 %1150
          %v1154 = vadd.f32 %v1069, %v1149
          %v1155 = vadd.f32 %v1070, %v1151
          %s1156 = sld [smem:[#allocation17 + $0x26]]
          %v1157 = vstv %s1156
          %v1158 = vmul.f32 %v1157, %v447
          %v1159 = vmul.f32 %v1157, %v448
          %v1160 = vmul.f32 %v1157, %v449
          %v1164 = vrot.slane %v1158, 5
          %v1165 = vrot.slane %v1159, 5
          %v1166 = vsel %vm1100, %v1164, %v1165
          %v1167 = vrot.slane %v1160, 5
          %v1168 = vsel %vm1100, %v1165, %v1167
          %1169 = vrot.lane.b32.xlu0 %v1166, 127
          %v1170 = vpop.permute.xlu0 %1169
          %1171 = vrot.lane.b32.xlu0 %v1168, 127
          %v1172 = vpop.permute.xlu0 %1171
          %v1175 = vadd.f32 %v1090, %v1170
          %v1176 = vadd.f32 %v1091, %v1172
          %s1177 = sld [smem:[#allocation17 + $0x27]]
          %v1178 = vstv %s1177
          %v1179 = vmul.f32 %v1178, %v447
          %v1180 = vmul.f32 %v1178, %v448
          %v1181 = vmul.f32 %v1178, %v449
          %v1185 = vrot.slane %v1179, 5
          %v1186 = vrot.slane %v1180, 5
          %v1187 = vsel %vm1100, %v1185, %v1186
          %v1188 = vrot.slane %v1181, 5
          %v1189 = vsel %vm1100, %v1186, %v1188
          %1190 = vrot.lane.b32.xlu0 %v1187, 127
          %v1191 = vpop.permute.xlu0 %1190
          %1192 = vrot.lane.b32.xlu0 %v1189, 127
          %v1193 = vpop.permute.xlu0 %1192
          %v1196 = vadd.f32 %v1112, %v1191
          %v1197 = vadd.f32 %v1113, %v1193
          %s1198 = sld [smem:[#allocation17 + $0x28]]
          %v1199 = vstv %s1198
          %v1200 = vmul.f32 %v1199, %v447
          %v1201 = vmul.f32 %v1199, %v448
          %v1202 = vmul.f32 %v1199, %v449
          %v1206 = vrot.slane %v1200, 5
          %v1207 = vrot.slane %v1201, 5
          %v1208 = vsel %vm1100, %v1206, %v1207
          %v1209 = vrot.slane %v1202, 5
          %v1210 = vsel %vm1100, %v1207, %v1209
          %1211 = vrot.lane.b32.xlu0 %v1208, 123
          %v1212 = vpop.permute.xlu0 %1211
          %1213 = vrot.lane.b32.xlu0 %v1210, 123
          %v1214 = vpop.permute.xlu0 %1213
          %v1217 = vadd.f32 %v1133, %v1212
          %v1218 = vadd.f32 %v1134, %v1214
          %s1219 = sld [smem:[#allocation17 + $0x29]]
          %v1220 = vstv %s1219
          %v1221 = vmul.f32 %v1220, %v447
          %v1222 = vmul.f32 %v1220, %v448
          %v1223 = vmul.f32 %v1220, %v449
          %v1227 = vrot.slane %v1221, 5
          %v1228 = vrot.slane %v1222, 5
          %v1229 = vsel %vm1100, %v1227, %v1228
          %v1230 = vrot.slane %v1223, 5
          %v1231 = vsel %vm1100, %v1228, %v1230
          %1232 = vrot.lane.b32.xlu0 %v1229, 123
          %v1233 = vpop.permute.xlu0 %1232
          %1234 = vrot.lane.b32.xlu0 %v1231, 123
          %v1235 = vpop.permute.xlu0 %1234
          %v1238 = vadd.f32 %v1154, %v1233
          %v1239 = vadd.f32 %v1155, %v1235
          %s1240 = sld [smem:[#allocation17 + $0x2a]]
          %v1241 = vstv %s1240
          %v1242 = vmul.f32 %v1241, %v447
          %v1243 = vmul.f32 %v1241, %v448
          %v1244 = vmul.f32 %v1241, %v449
          %vm1248 = vcmask 1041408
          %v1249 = vrot.slane %v1242, 6
          %v1250 = vrot.slane %v1243, 6
          %v1251 = vsel %vm1248, %v1249, %v1250
          %v1252 = vrot.slane %v1244, 6
          %v1253 = vsel %vm1248, %v1250, %v1252
          %1254 = vrot.lane.b32.xlu0 %v1251, 2
          %v1255 = vpop.permute.xlu0 %1254
          %1256 = vrot.lane.b32.xlu0 %v1253, 2
          %v1257 = vpop.permute.xlu0 %1256
          %v1260 = vadd.f32 %v1175, %v1255
          %v1261 = vadd.f32 %v1176, %v1257
          %s1262 = sld [smem:[#allocation17 + $0x2b]]
          %v1263 = vstv %s1262
          %v1264 = vmul.f32 %v1263, %v447
          %v1265 = vmul.f32 %v1263, %v448
          %v1266 = vmul.f32 %v1263, %v449
          %v1270 = vrot.slane %v1264, 6
          %v1271 = vrot.slane %v1265, 6
          %v1272 = vsel %vm1248, %v1270, %v1271
          %v1273 = vrot.slane %v1266, 6
          %v1274 = vsel %vm1248, %v1271, %v1273
          %1275 = vrot.lane.b32.xlu0 %v1272, 2
          %v1276 = vpop.permute.xlu0 %1275
          %1277 = vrot.lane.b32.xlu0 %v1274, 2
          %v1278 = vpop.permute.xlu0 %1277
          %v1281 = vadd.f32 %v1196, %v1276
          %v1282 = vadd.f32 %v1197, %v1278
          %s1283 = sld [smem:[#allocation17 + $0x2c]]
          %v1284 = vstv %s1283
          %v1285 = vmul.f32 %v1284, %v447
          %v1286 = vmul.f32 %v1284, %v448
          %v1287 = vmul.f32 %v1284, %v449
          %v1291 = vrot.slane %v1285, 6
          %v1292 = vrot.slane %v1286, 6
          %v1293 = vsel %vm1248, %v1291, %v1292
          %v1294 = vrot.slane %v1287, 6
          %v1295 = vsel %vm1248, %v1292, %v1294
          %1296 = vrot.lane.b32.xlu0 %v1293, 126
          %v1297 = vpop.permute.xlu0 %1296
          %1298 = vrot.lane.b32.xlu0 %v1295, 126
          %v1299 = vpop.permute.xlu0 %1298
          %v1302 = vadd.f32 %v1217, %v1297
          %v1303 = vadd.f32 %v1218, %v1299
          %s1304 = sld [smem:[#allocation17 + $0x2d]]
          %v1305 = vstv %s1304
          %v1306 = vmul.f32 %v1305, %v447
          %v1307 = vmul.f32 %v1305, %v448
          %v1308 = vmul.f32 %v1305, %v449
          %v1312 = vrot.slane %v1306, 6
          %v1313 = vrot.slane %v1307, 6
          %v1314 = vsel %vm1248, %v1312, %v1313
          %v1315 = vrot.slane %v1308, 6
          %v1316 = vsel %vm1248, %v1313, %v1315
          %1317 = vrot.lane.b32.xlu0 %v1314, 126
          %v1318 = vpop.permute.xlu0 %1317
          %1319 = vrot.lane.b32.xlu0 %v1316, 126
          %v1320 = vpop.permute.xlu0 %1319
          %v1323 = vadd.f32 %v1238, %v1318
          %v1324 = vadd.f32 %v1239, %v1320
          %s1325 = sld [smem:[#allocation17 + $0x2e]]
          %v1326 = vstv %s1325
          %v1327 = vmul.f32 %v1326, %v447
          %v1328 = vmul.f32 %v1326, %v448
          %v1329 = vmul.f32 %v1326, %v449
          %v1333 = vrot.slane %v1327, 6
          %v1334 = vrot.slane %v1328, 6
          %v1335 = vsel %vm1248, %v1333, %v1334
          %v1336 = vrot.slane %v1329, 6
          %v1337 = vsel %vm1248, %v1334, %v1336
          %1338 = vrot.lane.b32.xlu0 %v1335, 126
          %v1339 = vpop.permute.xlu0 %1338
          %1340 = vrot.lane.b32.xlu0 %v1337, 126
          %v1341 = vpop.permute.xlu0 %1340
          %v1344 = vadd.f32 %v1260, %v1339
          %v1345 = vadd.f32 %v1261, %v1341
          %s1346 = sld [smem:[#allocation17 + $0x2f]]
          %v1347 = vstv %s1346
          %v1348 = vmul.f32 %v1347, %v447
          %v1349 = vmul.f32 %v1347, %v448
          %v1350 = vmul.f32 %v1347, %v449
          %v1354 = vrot.slane %v1348, 6
          %v1355 = vrot.slane %v1349, 6
          %v1356 = vsel %vm1248, %v1354, %v1355
          %v1357 = vrot.slane %v1350, 6
          %v1358 = vsel %vm1248, %v1355, %v1357
          %1359 = vrot.lane.b32.xlu0 %v1356, 126
          %v1360 = vpop.permute.xlu0 %1359
          %1361 = vrot.lane.b32.xlu0 %v1358, 126
          %v1362 = vpop.permute.xlu0 %1361
          %v1365 = vadd.f32 %v1281, %v1360
          %v1366 = vadd.f32 %v1282, %v1362
          %s1367 = sld [smem:[#allocation17 + $0x30]]
          %v1368 = vstv %s1367
          %v1369 = vmul.f32 %v1368, %v447
          %v1370 = vmul.f32 %v1368, %v448
          %v1371 = vmul.f32 %v1368, %v449
          %v1375 = vrot.slane %v1369, 6
          %v1376 = vrot.slane %v1370, 6
          %v1377 = vsel %vm1248, %v1375, %v1376
          %v1378 = vrot.slane %v1371, 6
          %v1379 = vsel %vm1248, %v1376, %v1378
          %1380 = vrot.lane.b32.xlu0 %v1377, 122
          %v1381 = vpop.permute.xlu0 %1380
          %1382 = vrot.lane.b32.xlu0 %v1379, 122
          %v1383 = vpop.permute.xlu0 %1382
          %v1386 = vadd.f32 %v1302, %v1381
          %v1387 = vadd.f32 %v1303, %v1383
          %1390 = vrot.lane.b32.xlu0 %v1323, 127
          %v1391 = vpop.permute.xlu0 %1390
          %1392 = vrot.lane.b32.xlu0 %v1324, 127
          %v1393 = vpop.permute.xlu0 %1392
          %v1396 = vadd.f32 %v1386, %v1391
          %v1397 = vadd.f32 %v1387, %v1393
          %1400 = vrot.lane.b32.xlu0 %v1365, 127
          %v1401 = vpop.permute.xlu0 %1400
          %1402 = vrot.lane.b32.xlu0 %v1366, 127
          %v1403 = vpop.permute.xlu0 %1402
          %v1406 = vadd.f32 %v1344, %v1401
          %v1407 = vadd.f32 %v1345, %v1403
          %1410 = vrot.lane.b32.xlu0 %v1406, 126
          %v1411 = vpop.permute.xlu0 %1410
          %1412 = vrot.lane.b32.xlu0 %v1407, 126
          %v1413 = vpop.permute.xlu0 %1412
          %v1416 = vadd.f32 %v1396, %v1411
          %v1417 = vadd.f32 %v1397, %v1413
          %s1418 = smul.u32 %s29, 16
          %s1419 = scalar_lea.vmem [#allocation2], %s1418
          %vm1420 = vcmask 130048
          %1421 = vst.msk [vmem:[%s1419] sm:$0xff] %vm1420, %v1416
          %1422 = vst.msk [vmem:[%s1419 + $0x8] sm:$0xff] %vm1420, %v1417
          // Predicated region
          $region69: #{tpu_custom_call.1} parent=67 // pred_check
            %p1423 = pneg %p290
          $region70: #{tpu_custom_call.1} parent=67 // pred_check_branch
            %1425 = sbr.rel (%p1423) target = $region72
          $region71: #{tpu_custom_call.1} parent=67 // pred_region
            %vm1426 = vcmask 0
            %1427 = vst.msk [vmem:[#allocation9] sm:$0x1] %vm1426, %v1416
          $region72: #{tpu_custom_call.1} parent=67 // pred_fallthru
            _
          %v1428 = vld [vmem:[#allocation9] sm:$0x1]
          %v1430 = vlaneseq
          %v1431 = vshrl.u32 %v1430, 7
          %v1432 = vsub.s32 0, %v1431
          %v1433 = vrot.slane %v1428, %v1432
          %1434 = vset.pattern.permute.xlu0 0
          %1435 = vperm.xlu0 %1434, %v1433
          %v1436 = vpop.permute.xlu0 %1435
          %v1438 = vsub.f32 %v1416, %v1436
          %v1439 = vsub.f32 %v1417, %v1436
          %v1440 = vld [vmem:[#allocation7] sm:$0x1]
          %v1441 = vsel %vm1420, %v1438, 0.0
          %v1442 = vsel %vm1420, %v1439, 0.0
          %v1443 = vadd.f32 %v1441, %v1442
          %v1444 = vrot.slane %v1443, 4
          %v1445 = vadd.f32 %v1443, %v1444
          %v1446 = vrot.slane %v1445, 2
          %v1447 = vadd.f32 %v1445, %v1446
          %v1448 = vrot.slane %v1447, 1
          %v1449 = vadd.f32 %v1447, %v1448
          %v1450 = vadd.f32 %v1440, %v1449
          %vm1451 = vcmask 122880
          %1452 = vst.msk [vmem:[#allocation7] sm:$0x1] %vm1451, %v1450
          %v1453 = vld [vmem:[#allocation8] sm:$0x1]
          %v1454 = vmul.f32 %v1438, %v1438
          %v1455 = vmul.f32 %v1439, %v1439
          %v1456 = vsel %vm1420, %v1454, 0.0
          %v1457 = vsel %vm1420, %v1455, 0.0
          %v1458 = vadd.f32 %v1456, %v1457
          %v1459 = vrot.slane %v1458, 4
          %v1460 = vadd.f32 %v1458, %v1459
          %v1461 = vrot.slane %v1460, 2
          %v1462 = vadd.f32 %v1460, %v1461
          %v1463 = vrot.slane %v1462, 1
          %v1464 = vadd.f32 %v1462, %v1463
          %v1465 = vadd.f32 %v1453, %v1464
          %1466 = vst.msk [vmem:[#allocation8] sm:$0x1] %vm1451, %v1465
        $region68: #{tpu_custom_call.1} parent=35 // pred_fallthru
          _
        %p1467 = scmp.eq.s32.totalorder %s28, 1
        %p1468 = pnand %p1467, %p293
        %p1469 = pneg %p1468
        // Predicated region
        $region73: #{tpu_custom_call.1} parent=35 // pred_check
          _
        $region74: #{tpu_custom_call.1} parent=35 // pred_check_branch
          %1471 = sbr.rel (%p1468) target = $region76
        $region75: #{tpu_custom_call.1} parent=35 // pred_region
          %v1472 = vld [vmem:[#allocation7] sm:$0x1]
          %vm1473 = vcmask 122880
          %v1474 = vsel %vm1473, %v1472, 0.0
          %1475 = vadd.xlane.f32.xlu0 %v1474
          %v1476 = vpop.xlane.xlu0 %1475
          %v1477 = vld [vmem:[#allocation8] sm:$0x1]
          %v1478 = vsel %vm1473, %v1477, 0.0
          %1479 = vadd.xlane.f32.xlu0 %v1478
          %v1480 = vpop.xlane.xlu0 %1479
          %v1481 = vmul.f32 %v1476, 0.001953125
          %v1482 = vmul.f32 %v1480, 0.001953125
          %v1483 = vmul.f32 %v1481, %v1481
          %v1484 = vsub.f32 %v1482, %v1483
          %v1485 = vmax.f32 %v1484, 0.0
          %v1486 = vld [vmem:[#allocation9] sm:$0x1]
          %v1487 = vadd.f32 %v1486, %v1481
          %v1488 = vadd.f32 %v1485, 1e-05
          %v1489 = vrsqrt.pop %v1488
          %s1490 = sld [smem:[#allocation20]]
          %s1491 = sld [smem:[#allocation20 + $0x1]]
          %v1492 = vstv %s1490
          %v1493 = vmul.f32 %v1492, %v1489
          %vm1494 = vcmask 0
          %1495 = vst.msk [vmem:[#allocation10] sm:$0x1] %vm1494, %v1493
          %v1496 = vmul.f32 %v1487, %v1493
          %v1497 = vstv %s1491
          %v1498 = vsub.f32 %v1497, %v1496
          %1499 = vst.msk [vmem:[#allocation11] sm:$0x1] %vm1494, %v1498
        $region76: #{tpu_custom_call.1} parent=35 // pred_fallthru
          _
        %p1500 = pnand %p1467, %p291
        %p1501 = pneg %p1500
        // Predicated region
        $region77: #{tpu_custom_call.1} parent=35 // pred_check
          _
        $region78: #{tpu_custom_call.1} parent=35 // pred_check_branch
          %1503 = sbr.rel (%p1500) target = $region80
        $region79: #{tpu_custom_call.1} parent=35 // pred_region
          %s1504 = smul.u32 %s29, 16
          %s1505 = scalar_lea.vmem [#allocation2], %s1504
          %v1506 = vld [vmem:[%s1505] sm:$0xff]
          %v1507 = vld [vmem:[%s1505 + $0x8] sm:$0xff]
          %v1508 = vld [vmem:[#allocation10] sm:$0x1]
          %v1510 = vlaneseq
          %v1511 = vshrl.u32 %v1510, 7
          %v1512 = vsub.s32 0, %v1511
          %v1513 = vrot.slane %v1508, %v1512
          %1514 = vset.pattern.permute.xlu0 0
          %1515 = vperm.xlu0 %1514, %v1513
          %v1516 = vpop.permute.xlu0 %1515
          %v1518 = vmul.f32 %v1506, %v1516
          %v1519 = vmul.f32 %v1507, %v1516
          %v1520 = vld [vmem:[#allocation11] sm:$0x1]
          %v1522 = vlaneseq
          %v1523 = vshrl.u32 %v1522, 7
          %v1524 = vsub.s32 0, %v1523
          %v1525 = vrot.slane %v1520, %v1524
          %1526 = vset.pattern.permute.xlu0 0
          %1527 = vperm.xlu0 %1526, %v1525
          %v1528 = vpop.permute.xlu0 %1527
          %v1530 = vadd.f32 %v1518, %v1528
          %v1531 = vadd.f32 %v1519, %v1528
          %v1532 = vsub.f32 0.0, %v1530
          %v1533 = vsub.f32 0.0, %v1531
          %v1534 = vmul.f32 %v1532, 1.442695
          %v1535 = vpow.pop %v1534
          %v1536 = vmul.f32 %v1533, 1.442695
          %v1537 = vpow.pop %v1536
          %v1538 = vadd.f32 %v1535, 1.0
          %v1539 = vadd.f32 %v1537, 1.0
          %v1540 = vrcp.pop %v1538
          %v1541 = vmul.f32 1.0, %v1540
          %v1542 = vrcp.pop %v1539
          %v1543 = vmul.f32 1.0, %v1542
          %vm1544 = vcmask 130048
          %1545 = vst.msk [vmem:[#allocation12] sm:$0xff] %vm1544, %v1541
          %1546 = vst.msk [vmem:[#allocation12 + $0x8] sm:$0xff] %vm1544, %v1543
        $region80: #{tpu_custom_call.1} parent=35 // pred_fallthru
          _
        // Predicated region
        $region81: #{tpu_custom_call.1} parent=35 // pred_check
          %p1547 = pneg %p1467
        $region82: #{tpu_custom_call.1} parent=35 // pred_check_branch
          %1549 = sbr.rel (%p1547) target = $region84
        $region83: #{tpu_custom_call.1} parent=35 // pred_region
          %v1550 = vld [vmem:[%s247] sm:$0xff]
          %v1551 = vld [vmem:[%s247 + $0x8] sm:$0xff]
          %v1552 = vld [vmem:[%s247 + $0x10] sm:$0xff]
          %v1553 = vld [vmem:[%s247 + $0x18] sm:$0xff]
          %v1554 = vld [vmem:[%s247 + $0x20] sm:$0xff]
          %v1555 = vld [vmem:[%s247 + $0x28] sm:$0xff]
          %v1556 = vld [vmem:[%s247 + $0x30] sm:$0xff]
          %v1557 = vld [vmem:[%s247 + $0x38] sm:$0xff]
          %v1558 = vld [vmem:[#allocation12] sm:$0xff]
          %v1559 = vld [vmem:[#allocation12 + $0x8] sm:$0xff]
          %v1560 = vmul.f32 %v1550, %v1558
          %v1561 = vmul.f32 %v1551, %v1559
          %v1562 = vmul.f32 %v1552, %v1558
          %v1563 = vmul.f32 %v1553, %v1559
          %v1564 = vmul.f32 %v1554, %v1558
          %v1565 = vmul.f32 %v1555, %v1559
          %v1566 = vmul.f32 %v1556, %v1558
          %v1567 = vmul.f32 %v1557, %v1559
          %vm1568 = vcmask 130048
          %1569 = vst.msk [vmem:[%s284] sm:$0xff] %vm1568, %v1560
          %1570 = vst.msk [vmem:[%s284 + $0x8] sm:$0xff] %vm1568, %v1561
          %1571 = vst.msk [vmem:[%s284 + $0x10] sm:$0xff] %vm1568, %v1562
          %1572 = vst.msk [vmem:[%s284 + $0x18] sm:$0xff] %vm1568, %v1563
          %1573 = vst.msk [vmem:[%s284 + $0x20] sm:$0xff] %vm1568, %v1564
          %1574 = vst.msk [vmem:[%s284 + $0x28] sm:$0xff] %vm1568, %v1565
          %1575 = vst.msk [vmem:[%s284 + $0x30] sm:$0xff] %vm1568, %v1566
          %1576 = vst.msk [vmem:[%s284 + $0x38] sm:$0xff] %vm1568, %v1567
        $region84: #{tpu_custom_call.1} parent=35 // pred_fallthru
          _
        %s1577 = sand.u32 %s147, 1
        %s1578 = scalar_lea.sflag [#allocation15], %s1577
        %s1579 = sand.u32 %s147, 1
        %s1580 = smul.addr %s1579, 64
        %s1581 = scalar_lea.vmem [#allocation21], %s1580
        // Predicated region
        $region85: #{tpu_custom_call.1} parent=35 // pred_check
          %p1582 = pneg %p157
        $region86: #{tpu_custom_call.1} parent=35 // pred_check_branch
          %1584 = sbr.rel (%p1582) target = $region88
        $region87: #{tpu_custom_call.1} parent=35 // pred_region
          %s1585 = smul.u32 %s28, %s29
          %s1586 = smul.u32 %s28, %s30
          %s1587 = smul.u32 4, %s1586
          %s1589 = ssub.s32 1024, 1024
          %1590 = vsyncadd %s1578, %s1589
          %s1591 = smul.addr %s1587, 2
          %s1592 = smul.addr %s1585, 8
          %s1593 = sadd.s32 %s1591, %s1592
          %s1594 = smul.addr %s1593, 128
          %s1595 = scalar_lea.hbm %s4, %s1594
          %s1596 = sshll.u32 %s1581, 4
          %s1597 = int_to_ptr.vmem [resolvable:$true] %s1596
          %1602 = dma.vmem_to_hbm [thread:$0]  %s1597, 1024, %s1595, %s1578, 128, 128, 8
        $region88: #{tpu_custom_call.1} parent=35 // pred_fallthru
          _
      $region36: #{tpu_custom_call.1} parent=5 // pred_fallthru
        _
      %p1603 = scmp.le.s32.totalorder 2, %s18
      // Predicated region
      $region89: #{tpu_custom_call.1} parent=5 // pred_check
        %p1604 = pneg %p1603
      $region90: #{tpu_custom_call.1} parent=5 // pred_check_branch
        %1606 = sbr.rel (%p1604) target = $region92
      $region91: #{tpu_custom_call.1} parent=5 // pred_region
        %s1607 = ssub.s32 %s18, 2
        // Predicated region
        $region93: #{tpu_custom_call.1} parent=91 // pred_check
          %p1608 = pneg %p163
        $region94: #{tpu_custom_call.1} parent=91 // pred_check_branch
          %1610 = sbr.rel (%p1608) target = $region96
        $region95: #{tpu_custom_call.1} parent=91 // pred_region
          %s1611 = sand.u32 %s148, 1
          %s1612 = scalar_lea.sflag [#allocation15], %s1611
          %s1613 = sand.u32 %s148, 1
          %s1614 = smul.addr %s1613, 64
          %s1615 = scalar_lea.vmem [#allocation21], %s1614
          %1616 = dma.done %s1612, 1024
        $region96: #{tpu_custom_call.1} parent=91 // pred_fallthru
          _
      $region92: #{tpu_custom_call.1} parent=5 // pred_fallthru
        _
    $region6: #{tpu_custom_call.1} parent=1 // loop_footer
      %s22 = sadd.s32 1, %s18
    $region7: #{tpu_custom_call.1} parent=1 // loop_footer_branch
      %17 = sbr.rel target = $region3
    $region8: #{tpu_custom_call.1} parent=1 // loop_exit
      _
    %1617 = vsyncpa [#allocation14], 1
    %s1618 = scalar_lea.sflag [#allocation14], 1
    %1619 = vsyncpa %s1618, 1
    %1620 = vsyncpa [#allocation15], 1
    %s1621 = scalar_lea.sflag [#allocation15], 1
    %1622 = vsyncpa %s1621, 1
    %1623 = vsyncpa [#allocation16], 1
    %s1624 = scalar_lea.sflag [#allocation16], 1
    %1625 = vsyncpa %s1624, 1
    %1626 = vsyncpa [#allocation19], 1

</llo_original>
